<compile_context>
chip_gen: v5e
topology: v5e:2x2
jax: 0.10.0
libtpu: 0.0.40
codegen_flags: <defaults>
</compile_context>

<pallas_src>
import functools
import math

import jax
import jax.numpy as jnp
from jax.experimental import pallas as pl
from jax.experimental.pallas import tpu as pltpu

TEMPERATURE = 0.05
LN_EPS = 1e-5        # torch nn.LayerNorm default eps
NORM_EPS = 1e-12     # torch F.normalize default eps
MAX_ROW_TILE = 4096  # batch rows per grid step (upper bound; sweep 2048-4096)


def _round_up(n, m):
    return ((n + m - 1) // m) * m


def _block_diag(w, reps):
    r, c = w.shape
    out = jnp.zeros((reps * r, reps * c), w.dtype)
    for i in range(reps):
        out = out.at[i * r:(i + 1) * r, i * c:(i + 1) * c].set(w)
    return out


def _gelu_exact(v):
    # nn.GELU default is the exact (erf-based) formulation.
    # TODO(synk): the tanh approximation would move this work to the EUP slot
    # (largest remaining VALU consumer) but changes numerics vs. torch.
    return 0.5 * v * (1.0 + jax.lax.erf(v * (1.0 / math.sqrt(2.0))))


def mlp_classifier_kernel(x_ref, w0_ref, w1_ref, wo_ref, s_ref, vecs_ref,
                          out_ref, *, hid):
    inv_hid = 1.0 / hid

    x = x_ref[...]            # (tr, 128): 4 batch rows packed per vreg row
    smat = s_ref[...]         # (128, 128) block group-sum matrix
    vecs = vecs_ref[...]      # (8, 128) packed bias / LN-scale vectors
    b0, g0, be0 = vecs[0:1, :], vecs[1:2, :], vecs[2:3, :]
    b1, g1, be1 = vecs[3:4, :], vecs[4:5, :], vecs[5:6, :]
    bo = vecs[6:7, :out_ref.shape[-1]]

    def mm(a, w):
        return jnp.dot(a, w, preferred_element_type=jnp.float32)

    def group_sum(v):
        # Per-row sum over each 32-lane group (one packed batch row), broadcast
        # back to all lanes of the group, via the otherwise-idle MXU.
        return mm(v, smat)

    def layernorm(v, gamma, beta):
        mu = group_sum(v) * inv_hid
        c = v - mu
        var = group_sum(c * c) * inv_hid
        return c * jax.lax.rsqrt(var + LN_EPS) * gamma + beta

    # ---- Linear 0 (block-diagonal over the 4 packed rows) ----
    h = mm(x, w0_ref[...]) + b0
    skip = h
    # ---- GELU + LayerNorm0 + skip (torch skip fires at i == 1) ----
    h = _gelu_exact(h)
    h = layernorm(h, g0, be0)
    h = h + skip
    # ---- Linear 1 + GELU + LayerNorm1 ----
    h = mm(h, w1_ref[...]) + b1
    h = _gelu_exact(h)
    h = layernorm(h, g1, be1)
    # ---- F.normalize(dim=1); 1/temperature pre-folded into wo ----
    ss = group_sum(h * h)
    f = h * jax.lax.rsqrt(jnp.maximum(ss, NORM_EPS * NORM_EPS))
    # ---- final Linear (get_predictions), lane-packed output (4 x 16 = 64) ----
    out_ref[...] = (mm(f, wo_ref[...]) + bo).astype(out_ref.dtype)


def prepare_params(params):
    """One-time prep: block-diagonal packed weights, group-sum matrix, and all
    seven small vectors packed into a single (8, 128) array (one DMA)."""
    (w0, b0, g0, be0, w1, b1, g1, be1, wo, bo) = params
    in_f, hid = w0.shape
    out_f = wo.shape[1]
    assert in_f == hid and 128 % hid == 0, "packing assumes in_features == hidden_size | 128"
    pack = 128 // hid

    f32 = jnp.float32
    w0b = _block_diag(w0.astype(f32), pack)                  # (128, 128)
    w1b = _block_diag(w1.astype(f32), pack)                  # (128, 128)
    wob = _block_diag(wo.astype(f32) / TEMPERATURE, pack)    # (128, pack*out_f)

    grp = jnp.arange(pack * hid) // hid
    smat = (grp[:, None] == grp[None, :]).astype(f32)        # (128, 128)

    vecs = jnp.zeros((8, pack * hid), f32)
    for row, v in enumerate((b0, g0, be0, b1, g1, be1)):
        vecs = vecs.at[row, :].set(jnp.tile(v.astype(f32), pack))
    vecs = vecs.at[6, :pack * out_f].set(jnp.tile(bo.astype(f32), pack))

    return (w0b, w1b, wob, smat, vecs, in_f, hid, out_f, pack)


def model_forward(x, prepped, max_row_tile=MAX_ROW_TILE):
    w0b, w1b, wob, smat, vecs, in_f, hid, out_f, pack = prepped
    B = x.shape[0]
    assert x.shape[1] == in_f

    # Pack `pack` consecutive batch rows into one lane-dense row.  The reshape
    # is contiguous (bitcast-level); a tiny pad (<= pack-1 rows) is only added
    # when B is not a multiple of `pack`.
    b_pk = _round_up(B, pack)
    if b_pk != B:
        x = jnp.concatenate([x, jnp.zeros((b_pk - B, in_f), x.dtype)], axis=0)
    xp = x.reshape(b_pk // pack, pack * in_f).astype(jnp.float32)
    R = xp.shape[0]

    # Packed-row tile: large enough to amortize per-step overhead, but <= half
    # the rows so the grid keeps >=2 steps for the v7x megacore.
    tr = max(8, min(max_row_tile // pack, _round_up(pl.cdiv(R, 2), 8)))
    grid = pl.cdiv(R, tr)   # ragged last tile handled by Pallas block masking

    yp = pl.pallas_call(
        functools.partial(mlp_classifier_kernel, hid=hid),
        out_shape=jax.ShapeDtypeStruct((R, pack * out_f), jnp.float32),
        grid=(grid,),
        in_specs=[
            pl.BlockSpec((tr, pack * in_f), lambda i: (i, 0)),   # packed x
            pl.BlockSpec(w0b.shape, lambda i: (0, 0)),           # resident weights
            pl.BlockSpec(w1b.shape, lambda i: (0, 0)),
            pl.BlockSpec(wob.shape, lambda i: (0, 0)),
            pl.BlockSpec(smat.shape, lambda i: (0, 0)),          # group-sum matrix
            pl.BlockSpec(vecs.shape, lambda i: (0, 0)),          # packed vectors
        ],
        out_specs=pl.BlockSpec((tr, pack * out_f), lambda i: (i, 0)),
        compiler_params=pltpu.CompilerParams(
            dimension_semantics=("parallel",)),   # batch axis across TCs on v7x
    )(xp, w0b, w1b, wob, smat, vecs)

    y = yp.reshape(b_pk, out_f)      # contiguous reshape back to (rows, out_f)
    return y[:B] if b_pk != B else y


def _reference_forward(x, params):
    """Plain-JAX transcription of the torch forward (for checking)."""
    (w0, b0, g0, be0, w1, b1, g1, be1, wo, bo) = params

    def ln(v, g, b):
        mu = jnp.mean(v, axis=-1, keepdims=True)
        var = jnp.mean((v - mu) ** 2, axis=-1, keepdims=True)
        return (v - mu) * jax.lax.rsqrt(var + LN_EPS) * g + b

    h = x @ w0 + b0
    skip = h
    h = _gelu_exact(h)
    h = ln(h, g0, be0)
    h = h + skip
    h = h @ w1 + b1
    h = _gelu_exact(h)
    h = ln(h, g1, be1)
    nrm = jnp.sqrt(jnp.sum(h * h, axis=1, keepdims=True))
    f = h / jnp.maximum(nrm, NORM_EPS) / TEMPERATURE
    return f @ wo + bo


def init_params(key, in_features, hidden_size, out_features):
    # Weights stored as [in, out] (transpose of torch nn.Linear.weight).
    ks = jax.random.split(key, 6)
    scale = 0.1
    w0 = scale * jax.random.normal(ks[0], (in_features, hidden_size), jnp.float32)
    b0 = scale * jax.random.normal(ks[1], (hidden_size,), jnp.float32)
    g0 = jnp.ones((hidden_size,), jnp.float32)
    be0 = jnp.zeros((hidden_size,), jnp.float32)
    w1 = scale * jax.random.normal(ks[2], (hidden_size, hidden_size), jnp.float32)
    b1 = scale * jax.random.normal(ks[3], (hidden_size,), jnp.float32)
    g1 = jnp.ones((hidden_size,), jnp.float32)
    be1 = jnp.zeros((hidden_size,), jnp.float32)
    wo = scale * jax.random.normal(ks[4], (hidden_size, out_features), jnp.float32)
    bo = scale * jax.random.normal(ks[5], (out_features,), jnp.float32)
    return (w0, b0, g0, be0, w1, b1, g1, be1, wo, bo)


if __name__ == "__main__":
    # B is intentionally not a multiple of the row tile: exercises the masked
    # ragged last block and a 2-step ("parallel") batch grid.
    B, IN_F, HID, OUT_F = 600, 32, 32, 16
    key = jax.random.PRNGKey(0)
    kx, kp = jax.random.split(key)
    x = jax.random.normal(kx, (B, IN_F), jnp.float32)
    params = init_params(kp, IN_F, HID, OUT_F)
    prepped = prepare_params(params)

    out = model_forward(x, prepped)
    out = jax.block_until_ready(out)

    ref = _reference_forward(x, params)
    assert out.shape == (B, OUT_F)
    # Deliberately relaxed tolerance: the kernel's LayerNorm/normalize
    # reductions ride the MXU (f32 matmuls are emulated with bf16 passes),
    # while the reference uses exact f32 VPU reductions.  With multi-pass
    # emulation the observed error is far below this bound.
    assert jnp.allclose(out, ref, atol=1e-2, rtol=1e-2), "mismatch vs reference"

    # TODO(synk): GradReverse only affects the backward pass (gradient
    # negation); the forward is identity, so it is not represented here.
    print("KERNEL_OK")
</pallas_src>

<mosaic_0001>
module attributes {stable_mosaic.version = 11 : i64} {
  func.func @mlp_classifier_kernel(%arg0: i32, %arg1: memref<80x128xf32, #tpu.memory_space<vmem>>, %arg2: memref<128x128xf32, #tpu.memory_space<vmem>>, %arg3: memref<128x128xf32, #tpu.memory_space<vmem>>, %arg4: memref<128x64xf32, #tpu.memory_space<vmem>>, %arg5: memref<128x128xf32, #tpu.memory_space<vmem>>, %arg6: memref<8x128xf32, #tpu.memory_space<vmem>>, %arg7: memref<80x64xf32, #tpu.memory_space<vmem>>) attributes {dimension_semantics = [#tpu.dimension_semantics<parallel>], iteration_bounds = array<i64: 2>, scalar_prefetch = 0 : i64, scratch_operands = 0 : i64, tpu.core_type = #tpu.core_type<tc>, window_params = [{transform_indices = @transform_0, window_bounds = array<i64: 80, 128>}, {pipeline_mode = #tpu.pipeline_mode<synchronous>, transform_indices = @transform_1, window_bounds = array<i64: 128, 128>}, {pipeline_mode = #tpu.pipeline_mode<synchronous>, transform_indices = @transform_2, window_bounds = array<i64: 128, 128>}, {pipeline_mode = #tpu.pipeline_mode<synchronous>, transform_indices = @transform_3, window_bounds = array<i64: 128, 64>}, {pipeline_mode = #tpu.pipeline_mode<synchronous>, transform_indices = @transform_4, window_bounds = array<i64: 128, 128>}, {pipeline_mode = #tpu.pipeline_mode<synchronous>, transform_indices = @transform_5, window_bounds = array<i64: 8, 128>}, {transform_indices = @transform_6, window_bounds = array<i64: 80, 64>}]} {
    %c0 = arith.constant 0 : index
    %c0_0 = arith.constant 0 : index
    %0 = vector.load %arg1[%c0, %c0_0] : memref<80x128xf32, #tpu.memory_space<vmem>>, vector<80x128xf32>
    %c0_1 = arith.constant 0 : index
    %c0_2 = arith.constant 0 : index
    %1 = vector.load %arg5[%c0_1, %c0_2] : memref<128x128xf32, #tpu.memory_space<vmem>>, vector<128x128xf32>
    %c0_3 = arith.constant 0 : index
    %c0_4 = arith.constant 0 : index
    %2 = vector.load %arg6[%c0_3, %c0_4] : memref<8x128xf32, #tpu.memory_space<vmem>>, vector<8x128xf32>
    %3 = vector.extract_strided_slice %2 {offsets = [0, 0], sizes = [1, 128], strides = [1, 1]} : vector<8x128xf32> to vector<1x128xf32>
    %4 = vector.extract_strided_slice %2 {offsets = [1, 0], sizes = [1, 128], strides = [1, 1]} : vector<8x128xf32> to vector<1x128xf32>
    %5 = vector.extract_strided_slice %2 {offsets = [2, 0], sizes = [1, 128], strides = [1, 1]} : vector<8x128xf32> to vector<1x128xf32>
    %6 = vector.extract_strided_slice %2 {offsets = [3, 0], sizes = [1, 128], strides = [1, 1]} : vector<8x128xf32> to vector<1x128xf32>
    %7 = vector.extract_strided_slice %2 {offsets = [4, 0], sizes = [1, 128], strides = [1, 1]} : vector<8x128xf32> to vector<1x128xf32>
    %8 = vector.extract_strided_slice %2 {offsets = [5, 0], sizes = [1, 128], strides = [1, 1]} : vector<8x128xf32> to vector<1x128xf32>
    %9 = vector.extract_strided_slice %2 {offsets = [6, 0], sizes = [1, 64], strides = [1, 1]} : vector<8x128xf32> to vector<1x64xf32>
    %c0_5 = arith.constant 0 : index
    %c0_6 = arith.constant 0 : index
    %10 = vector.load %arg2[%c0_5, %c0_6] : memref<128x128xf32, #tpu.memory_space<vmem>>, vector<128x128xf32>
    %cst = arith.constant dense<0.000000e+00> : vector<80x128xf32>
    %11 = tpu.matmul %0, %10, %cst {dimension_numbers = #tpu.dot_dimension_numbers<[1], [0], [0], [1], [0, 0, 1, 1], [], []>} : vector<80x128xf32>, vector<128x128xf32>, vector<80x128xf32> -> vector<80x128xf32>
    %12 = vector.broadcast %3 : vector<1x128xf32> to vector<80x128xf32>
    %13 = arith.addf %11, %12 : vector<80x128xf32>
    %cst_7 = arith.constant 5.000000e-01 : f32
    %14 = vector.broadcast %cst_7 : f32 to vector<80x128xf32>
    %15 = arith.mulf %14, %13 : vector<80x128xf32>
    %cst_8 = arith.constant 0.707106769 : f32
    %16 = vector.broadcast %cst_8 : f32 to vector<80x128xf32>
    %17 = arith.mulf %13, %16 : vector<80x128xf32>
    %18 = math.erf %17 : vector<80x128xf32>
    %cst_9 = arith.constant 1.000000e+00 : f32
    %19 = vector.broadcast %cst_9 : f32 to vector<80x128xf32>
    %20 = arith.addf %19, %18 : vector<80x128xf32>
    %21 = arith.mulf %15, %20 : vector<80x128xf32>
    %cst_10 = arith.constant dense<0.000000e+00> : vector<80x128xf32>
    %22 = tpu.matmul %21, %1, %cst_10 {dimension_numbers = #tpu.dot_dimension_numbers<[1], [0], [0], [1], [0, 0, 1, 1], [], []>} : vector<80x128xf32>, vector<128x128xf32>, vector<80x128xf32> -> vector<80x128xf32>
    %cst_11 = arith.constant 3.125000e-02 : f32
    %23 = vector.broadcast %cst_11 : f32 to vector<80x128xf32>
    %24 = arith.mulf %22, %23 : vector<80x128xf32>
    %25 = arith.subf %21, %24 : vector<80x128xf32>
    %26 = arith.mulf %25, %25 : vector<80x128xf32>
    %cst_12 = arith.constant dense<0.000000e+00> : vector<80x128xf32>
    %27 = tpu.matmul %26, %1, %cst_12 {dimension_numbers = #tpu.dot_dimension_numbers<[1], [0], [0], [1], [0, 0, 1, 1], [], []>} : vector<80x128xf32>, vector<128x128xf32>, vector<80x128xf32> -> vector<80x128xf32>
    %cst_13 = arith.constant 3.125000e-02 : f32
    %28 = vector.broadcast %cst_13 : f32 to vector<80x128xf32>
    %29 = arith.mulf %27, %28 : vector<80x128xf32>
    %cst_14 = arith.constant 9.99999974E-6 : f32
    %30 = vector.broadcast %cst_14 : f32 to vector<80x128xf32>
    %31 = arith.addf %29, %30 : vector<80x128xf32>
    %32 = math.rsqrt %31 : vector<80x128xf32>
    %33 = arith.mulf %25, %32 : vector<80x128xf32>
    %34 = vector.broadcast %4 : vector<1x128xf32> to vector<80x128xf32>
    %35 = arith.mulf %33, %34 : vector<80x128xf32>
    %36 = vector.broadcast %5 : vector<1x128xf32> to vector<80x128xf32>
    %37 = arith.addf %35, %36 : vector<80x128xf32>
    %38 = arith.addf %37, %13 : vector<80x128xf32>
    %c0_15 = arith.constant 0 : index
    %c0_16 = arith.constant 0 : index
    %39 = vector.load %arg3[%c0_15, %c0_16] : memref<128x128xf32, #tpu.memory_space<vmem>>, vector<128x128xf32>
    %cst_17 = arith.constant dense<0.000000e+00> : vector<80x128xf32>
    %40 = tpu.matmul %38, %39, %cst_17 {dimension_numbers = #tpu.dot_dimension_numbers<[1], [0], [0], [1], [0, 0, 1, 1], [], []>} : vector<80x128xf32>, vector<128x128xf32>, vector<80x128xf32> -> vector<80x128xf32>
    %41 = vector.broadcast %6 : vector<1x128xf32> to vector<80x128xf32>
    %42 = arith.addf %40, %41 : vector<80x128xf32>
    %cst_18 = arith.constant 5.000000e-01 : f32
    %43 = vector.broadcast %cst_18 : f32 to vector<80x128xf32>
    %44 = arith.mulf %43, %42 : vector<80x128xf32>
    %cst_19 = arith.constant 0.707106769 : f32
    %45 = vector.broadcast %cst_19 : f32 to vector<80x128xf32>
    %46 = arith.mulf %42, %45 : vector<80x128xf32>
    %47 = math.erf %46 : vector<80x128xf32>
    %cst_20 = arith.constant 1.000000e+00 : f32
    %48 = vector.broadcast %cst_20 : f32 to vector<80x128xf32>
    %49 = arith.addf %48, %47 : vector<80x128xf32>
    %50 = arith.mulf %44, %49 : vector<80x128xf32>
    %cst_21 = arith.constant dense<0.000000e+00> : vector<80x128xf32>
    %51 = tpu.matmul %50, %1, %cst_21 {dimension_numbers = #tpu.dot_dimension_numbers<[1], [0], [0], [1], [0, 0, 1, 1], [], []>} : vector<80x128xf32>, vector<128x128xf32>, vector<80x128xf32> -> vector<80x128xf32>
    %cst_22 = arith.constant 3.125000e-02 : f32
    %52 = vector.broadcast %cst_22 : f32 to vector<80x128xf32>
    %53 = arith.mulf %51, %52 : vector<80x128xf32>
    %54 = arith.subf %50, %53 : vector<80x128xf32>
    %55 = arith.mulf %54, %54 : vector<80x128xf32>
    %cst_23 = arith.constant dense<0.000000e+00> : vector<80x128xf32>
    %56 = tpu.matmul %55, %1, %cst_23 {dimension_numbers = #tpu.dot_dimension_numbers<[1], [0], [0], [1], [0, 0, 1, 1], [], []>} : vector<80x128xf32>, vector<128x128xf32>, vector<80x128xf32> -> vector<80x128xf32>
    %cst_24 = arith.constant 3.125000e-02 : f32
    %57 = vector.broadcast %cst_24 : f32 to vector<80x128xf32>
    %58 = arith.mulf %56, %57 : vector<80x128xf32>
    %cst_25 = arith.constant 9.99999974E-6 : f32
    %59 = vector.broadcast %cst_25 : f32 to vector<80x128xf32>
    %60 = arith.addf %58, %59 : vector<80x128xf32>
    %61 = math.rsqrt %60 : vector<80x128xf32>
    %62 = arith.mulf %54, %61 : vector<80x128xf32>
    %63 = vector.broadcast %7 : vector<1x128xf32> to vector<80x128xf32>
    %64 = arith.mulf %62, %63 : vector<80x128xf32>
    %65 = vector.broadcast %8 : vector<1x128xf32> to vector<80x128xf32>
    %66 = arith.addf %64, %65 : vector<80x128xf32>
    %67 = arith.mulf %66, %66 : vector<80x128xf32>
    %cst_26 = arith.constant dense<0.000000e+00> : vector<80x128xf32>
    %68 = tpu.matmul %67, %1, %cst_26 {dimension_numbers = #tpu.dot_dimension_numbers<[1], [0], [0], [1], [0, 0, 1, 1], [], []>} : vector<80x128xf32>, vector<128x128xf32>, vector<80x128xf32> -> vector<80x128xf32>
    %cst_27 = arith.constant 1.000000e-24 : f32
    %69 = vector.broadcast %cst_27 : f32 to vector<80x128xf32>
    %70 = arith.maximumf %68, %69 : vector<80x128xf32>
    %71 = math.rsqrt %70 : vector<80x128xf32>
    %72 = arith.mulf %66, %71 : vector<80x128xf32>
    %c0_28 = arith.constant 0 : index
    %c0_29 = arith.constant 0 : index
    %73 = vector.load %arg4[%c0_28, %c0_29] : memref<128x64xf32, #tpu.memory_space<vmem>>, vector<128x64xf32>
    %cst_30 = arith.constant dense<0.000000e+00> : vector<80x64xf32>
    %74 = tpu.matmul %72, %73, %cst_30 {dimension_numbers = #tpu.dot_dimension_numbers<[1], [0], [0], [1], [0, 0, 1, 1], [], []>} : vector<80x128xf32>, vector<128x64xf32>, vector<80x64xf32> -> vector<80x64xf32>
    %75 = vector.broadcast %9 : vector<1x64xf32> to vector<80x64xf32>
    %76 = arith.addf %74, %75 : vector<80x64xf32>
    %c0_31 = arith.constant 0 : index
    %c0_32 = arith.constant 0 : index
    %77 = vector.load %arg7[%c0_31, %c0_32] : memref<80x64xf32, #tpu.memory_space<vmem>>, vector<80x64xf32>
    tpu.vector_store %arg7[%c0_31, %c0_32], %76 {strides = array<i32>} : memref<80x64xf32, #tpu.memory_space<vmem>>, vector<80x64xf32>,
    return
  }
  func.func @transform_0(%arg0: i32) -> (i32, i32) {
    %c0_i32 = arith.constant 0 : i32
    %c0_i32_0 = arith.constant 0 : i32
    return %arg0, %c0_i32 : i32, i32
  }
  func.func @transform_1(%arg0: i32) -> (i32, i32) {
    %c0_i32 = arith.constant 0 : i32
    %c0_i32_0 = arith.constant 0 : i32
    %c0_i32_1 = arith.constant 0 : i32
    return %c0_i32, %c0_i32_0 : i32, i32
  }
  func.func @transform_2(%arg0: i32) -> (i32, i32) {
    %c0_i32 = arith.constant 0 : i32
    %c0_i32_0 = arith.constant 0 : i32
    %c0_i32_1 = arith.constant 0 : i32
    return %c0_i32, %c0_i32_0 : i32, i32
  }
  func.func @transform_3(%arg0: i32) -> (i32, i32) {
    %c0_i32 = arith.constant 0 : i32
    %c0_i32_0 = arith.constant 0 : i32
    %c0_i32_1 = arith.constant 0 : i32
    return %c0_i32, %c0_i32_0 : i32, i32
  }
  func.func @transform_4(%arg0: i32) -> (i32, i32) {
    %c0_i32 = arith.constant 0 : i32
    %c0_i32_0 = arith.constant 0 : i32
    %c0_i32_1 = arith.constant 0 : i32
    return %c0_i32, %c0_i32_0 : i32, i32
  }
  func.func @transform_5(%arg0: i32) -> (i32, i32) {
    %c0_i32 = arith.constant 0 : i32
    %c0_i32_0 = arith.constant 0 : i32
    %c0_i32_1 = arith.constant 0 : i32
    return %c0_i32, %c0_i32_0 : i32, i32
  }
  func.func @transform_6(%arg0: i32) -> (i32, i32) {
    %c0_i32 = arith.constant 0 : i32
    %c0_i32_0 = arith.constant 0 : i32
    return %arg0, %c0_i32 : i32, i32
  }
}

</mosaic_0001>

<llo_original>
// kernel: tpu_custom_call.1
$region0: #{tpu_custom_call.1}
  #allocation0 [shape = 'u32[]', space=smem, size = 0x4, offset = 0x4, fixed_abs, tag = 'smem constant byte address 0x4 - core index']
  #allocation1 [shape = 'u32[72,128]{1,0:T(1,128)}', space=vmem, size = 0x9000, scoped, tag = 'internal scratch']
  %s0 = inlined_call_operand.vmem [shape: f32[150,128], index: 0, kind: input, shape index: {}]
  %s1 = inlined_call_operand.hbm [shape: f32[128,128], index: 1, kind: input, shape index: {}]
  %s2 = inlined_call_operand.hbm [shape: f32[128,128], index: 2, kind: input, shape index: {}]
  %s3 = inlined_call_operand.vmem [shape: f32[128,64], index: 3, kind: input, shape index: {}]
  %s4 = inlined_call_operand.hbm [shape: f32[128,128], index: 4, kind: input, shape index: {}]
  %s5 = inlined_call_operand.vmem [shape: f32[8,128], index: 5, kind: input, shape index: {}]
  %s6 = inlined_call_operand.vmem [shape: f32[150,64], index: 6, kind: output, shape index: {}]
  %s7 = sld [smem:[#allocation0]]
  $region117: #{tpu_custom_call.1} parent=0
    _
  %s9 = ssub.s32 1, %s7
  %s10 = scalar_select 0, %s9, %s7
  $region1: #{tpu_custom_call.1} parent=0
    #allocation2 [shape = 'u8[65536]{0}', space=vmem, size = 0x10000, scoped, tag = 'input window, operand 1, single buffered']
    #allocation3 [shape = 's32[2]{0}', space=sflag, size = 0x8, scoped, tag = 'scoped memory for tpu_custom_call.1']
    #allocation4 [shape = 'u8[65536]{0}', space=vmem, size = 0x10000, scoped, tag = 'input window, operand 2, single buffered']
    #allocation5 [shape = 's32[1]{0}', space=sflag, size = 0x4, scoped, tag = 'scoped memory for tpu_custom_call.1']
    #allocation6 [shape = 'u8[65536]{0}', space=vmem, size = 0x10000, scoped, tag = 'input window, operand 4, single buffered']
    #allocation7 [shape = 'u8[81920]{0}', space=vmem, size = 0x14000, scoped, tag = 'output window, operand 0']
    %11 = vsyncpa [#allocation3], 0
    %12 = vsyncpa [#allocation5], 0
    loop: start=0, step=1, limit=4
    $region2: #{tpu_custom_call.1} parent=1 // loop_pre_header
      _
    $region3: #{tpu_custom_call.1} parent=1 // loop_header
      %s14 = sphi 0, %s18
      %p15 = scmp.ge.s32.totalorder %s14, 4
      %s24 = sphi 0, %s26
      %s27 = sphi 0, %s24
      %s28 = sphi 0, %s27
      %s44 = sphi 0, %s28
      %s48 = sphi 0, %s48
      %s50 = sphi 0, %s48
      %s51 = sphi 0, %s50
      %s65 = sphi 0, %s51
      %s69 = sphi 0, %s69
      %s71 = sphi 0, %s69
      %s72 = sphi 0, %s71
      %s86 = sphi 0, %s72
      %s90 = sphi 0, %s90
      %s92 = sphi 0, %s90
      %s93 = sphi 0, %s92
      %s107 = sphi 0, %s93
      %s111 = sphi 0, %s111
      %s113 = sphi 0, %s111
      %s114 = sphi 0, %s113
      %s128 = sphi 0, %s114
      %s132 = sphi 0, %s132
      %s134 = sphi 0, %s132
      %s135 = sphi 0, %s134
      %s149 = sphi 0, %s135
      %s155 = sphi 0, %s157
      %s158 = sphi 0, %s155
      %s159 = sphi 0, %s158
      %s175 = sphi 0, %s159
    $region4: #{tpu_custom_call.1} parent=1 // loop_header_branch
      %17 = sbr.rel (%p15) target = $region8
    $region5: #{tpu_custom_call.1} parent=1 // loop_body
      %s19 = ssub.s32 %s14, 1
      %s20 = ssub.s32 %s14, 2
      %s21 = sadd.s32 %s14, 1
      %s22 = ssub.s32 %s14, %s21
      %p23 = scmp.eq.s32.totalorder %s22, 0
      %s25 = sadd.s32 %s24, 1
      %s26 = scalar_select %p23, %s24, %s25
      %p29 = pneg %p23
      %p30 = scmp.eq.s32.totalorder %s14, 1
      %p31 = por %p29, %p30
      %p32 = scmp.ne.s32.totalorder %s24, %s27
      %p33 = scmp.eq.s32.totalorder %s14, 0
      %p34 = por %p32, %p33
      %p35 = scmp.ne.s32.totalorder %s24, %s27
      %p36 = scmp.eq.s32.totalorder %s19, 1
      %p37 = por %p35, %p36
      %p38 = scmp.ne.s32.totalorder %s27, %s28
      %p39 = scmp.eq.s32.totalorder %s19, 0
      %p40 = por %p38, %p39
      %p41 = scmp.ne.s32.totalorder %s27, %s28
      %p42 = scmp.eq.s32.totalorder %s20, 1
      %p43 = por %p41, %p42
      %p45 = scmp.ne.s32.totalorder %s28, %s44
      %p46 = scmp.eq.s32.totalorder %s20, 0
      %p47 = por %p45, %p46
      %s49 = sadd.s32 %s48, 1
      %p52 = scmp.eq.s32.totalorder %s14, 1
      %p53 = scmp.ne.s32.totalorder %s48, %s50
      %p54 = scmp.eq.s32.totalorder %s14, 0
      %p55 = por %p53, %p54
      %p56 = scmp.ne.s32.totalorder %s48, %s50
      %p57 = scmp.eq.s32.totalorder %s19, 1
      %p58 = por %p56, %p57
      %p59 = scmp.ne.s32.totalorder %s50, %s51
      %p60 = scmp.eq.s32.totalorder %s19, 0
      %p61 = por %p59, %p60
      %p62 = scmp.ne.s32.totalorder %s50, %s51
      %p63 = scmp.eq.s32.totalorder %s20, 1
      %p64 = por %p62, %p63
      %p66 = scmp.ne.s32.totalorder %s51, %s65
      %p67 = scmp.eq.s32.totalorder %s20, 0
      %p68 = por %p66, %p67
      %s70 = sadd.s32 %s69, 1
      %p73 = scmp.eq.s32.totalorder %s14, 1
      %p74 = scmp.ne.s32.totalorder %s69, %s71
      %p75 = scmp.eq.s32.totalorder %s14, 0
      %p76 = por %p74, %p75
      %p77 = scmp.ne.s32.totalorder %s69, %s71
      %p78 = scmp.eq.s32.totalorder %s19, 1
      %p79 = por %p77, %p78
      %p80 = scmp.ne.s32.totalorder %s71, %s72
      %p81 = scmp.eq.s32.totalorder %s19, 0
      %p82 = por %p80, %p81
      %p83 = scmp.ne.s32.totalorder %s71, %s72
      %p84 = scmp.eq.s32.totalorder %s20, 1
      %p85 = por %p83, %p84
      %p87 = scmp.ne.s32.totalorder %s72, %s86
      %p88 = scmp.eq.s32.totalorder %s20, 0
      %p89 = por %p87, %p88
      %s91 = sadd.s32 %s90, 1
      %p94 = scmp.eq.s32.totalorder %s14, 1
      %p95 = scmp.ne.s32.totalorder %s90, %s92
      %p96 = scmp.eq.s32.totalorder %s14, 0
      %p97 = por %p95, %p96
      %p98 = scmp.ne.s32.totalorder %s90, %s92
      %p99 = scmp.eq.s32.totalorder %s19, 1
      %p100 = por %p98, %p99
      %p101 = scmp.ne.s32.totalorder %s92, %s93
      %p102 = scmp.eq.s32.totalorder %s19, 0
      %p103 = por %p101, %p102
      %p104 = scmp.ne.s32.totalorder %s92, %s93
      %p105 = scmp.eq.s32.totalorder %s20, 1
      %p106 = por %p104, %p105
      %p108 = scmp.ne.s32.totalorder %s93, %s107
      %p109 = scmp.eq.s32.totalorder %s20, 0
      %p110 = por %p108, %p109
      %s112 = sadd.s32 %s111, 1
      %p115 = scmp.eq.s32.totalorder %s14, 1
      %p116 = scmp.ne.s32.totalorder %s111, %s113
      %p117 = scmp.eq.s32.totalorder %s14, 0
      %p118 = por %p116, %p117
      %p119 = scmp.ne.s32.totalorder %s111, %s113
      %p120 = scmp.eq.s32.totalorder %s19, 1
      %p121 = por %p119, %p120
      %p122 = scmp.ne.s32.totalorder %s113, %s114
      %p123 = scmp.eq.s32.totalorder %s19, 0
      %p124 = por %p122, %p123
      %p125 = scmp.ne.s32.totalorder %s113, %s114
      %p126 = scmp.eq.s32.totalorder %s20, 1
      %p127 = por %p125, %p126
      %p129 = scmp.ne.s32.totalorder %s114, %s128
      %p130 = scmp.eq.s32.totalorder %s20, 0
      %p131 = por %p129, %p130
      %s133 = sadd.s32 %s132, 1
      %p136 = scmp.eq.s32.totalorder %s14, 1
      %p137 = scmp.ne.s32.totalorder %s132, %s134
      %p138 = scmp.eq.s32.totalorder %s14, 0
      %p139 = por %p137, %p138
      %p140 = scmp.ne.s32.totalorder %s132, %s134
      %p141 = scmp.eq.s32.totalorder %s19, 1
      %p142 = por %p140, %p141
      %p143 = scmp.ne.s32.totalorder %s134, %s135
      %p144 = scmp.eq.s32.totalorder %s19, 0
      %p145 = por %p143, %p144
      %p146 = scmp.ne.s32.totalorder %s134, %s135
      %p147 = scmp.eq.s32.totalorder %s20, 1
      %p148 = por %p146, %p147
      %p150 = scmp.ne.s32.totalorder %s135, %s149
      %p151 = scmp.eq.s32.totalorder %s20, 0
      %p152 = por %p150, %p151
      %s153 = ssub.s32 %s14, %s21
      %p154 = scmp.eq.s32.totalorder %s153, 0
      %s156 = sadd.s32 %s155, 1
      %s157 = scalar_select %p154, %s155, %s156
      %p160 = pneg %p154
      %p161 = scmp.eq.s32.totalorder %s14, 1
      %p162 = por %p160, %p161
      %p163 = scmp.ne.s32.totalorder %s155, %s158
      %p164 = scmp.eq.s32.totalorder %s14, 0
      %p165 = por %p163, %p164
      %p166 = scmp.ne.s32.totalorder %s155, %s158
      %p167 = scmp.eq.s32.totalorder %s19, 1
      %p168 = por %p166, %p167
      %p169 = scmp.ne.s32.totalorder %s158, %s159
      %p170 = scmp.eq.s32.totalorder %s19, 0
      %p171 = por %p169, %p170
      %p172 = scmp.ne.s32.totalorder %s158, %s159
      %p173 = scmp.eq.s32.totalorder %s20, 1
      %p174 = por %p172, %p173
      %p176 = scmp.ne.s32.totalorder %s159, %s175
      %p177 = scmp.eq.s32.totalorder %s20, 0
      %p178 = por %p176, %p177
      %p179 = scmp.le.s32.totalorder 1, %s14
      %p180 = scmp.lt.s32.totalorder %s14, 3
      %p181 = pnand %p179, %p180
      %p182 = pneg %p181
      // Predicated region
      $region9: #{tpu_custom_call.1} parent=5 // pred_check
        _
      $region10: #{tpu_custom_call.1} parent=5 // pred_check_branch
        %184 = sbr.rel (%p181) target = $region12
      $region11: #{tpu_custom_call.1} parent=5 // pred_region
        %s185 = ssub.s32 %s14, 1
        // Predicated region
        $region13: #{tpu_custom_call.1} parent=11 // pred_check
          %p186 = pneg %p61
        $region14: #{tpu_custom_call.1} parent=11 // pred_check_branch
          %188 = sbr.rel (%p186) target = $region16
        $region15: #{tpu_custom_call.1} parent=11 // pred_region
          %190 = vsyncadd [#allocation3], 0
          %s191 = sshll.u32 %s1, 4
          %s192 = int_to_ptr.hbm [resolvable:$true] %s191
          %s193 = sshll.u32 [#allocation2], 4
          %s194 = int_to_ptr.vmem [resolvable:$true] %s193
          %199 = dma.hbm_to_vmem [thread:$0]  %s192, 2048, %s194, [#allocation3], 128, 128, 8
        $region16: #{tpu_custom_call.1} parent=11 // pred_fallthru
          _
        // Predicated region
        $region17: #{tpu_custom_call.1} parent=11 // pred_check
          %p200 = pneg %p82
        $region18: #{tpu_custom_call.1} parent=11 // pred_check_branch
          %202 = sbr.rel (%p200) target = $region20
        $region19: #{tpu_custom_call.1} parent=11 // pred_region
          %204 = vsyncadd [#allocation5], 0
          %s205 = sshll.u32 %s2, 4
          %s206 = int_to_ptr.hbm [resolvable:$true] %s205
          %s207 = sshll.u32 [#allocation4], 4
          %s208 = int_to_ptr.vmem [resolvable:$true] %s207
          %213 = dma.hbm_to_vmem [thread:$0]  %s206, 2048, %s208, [#allocation5], 128, 128, 8
        $region20: #{tpu_custom_call.1} parent=11 // pred_fallthru
          _
        // Predicated region
        $region21: #{tpu_custom_call.1} parent=11 // pred_check
          %p214 = pneg %p103
        $region22: #{tpu_custom_call.1} parent=11 // pred_check_branch
          %216 = sbr.rel (%p214) target = $region24
        $region23: #{tpu_custom_call.1} parent=11 // pred_region
          _
        $region24: #{tpu_custom_call.1} parent=11 // pred_fallthru
          _
        // Predicated region
        $region25: #{tpu_custom_call.1} parent=11 // pred_check
          %p217 = pneg %p124
        $region26: #{tpu_custom_call.1} parent=11 // pred_check_branch
          %219 = sbr.rel (%p217) target = $region28
        $region27: #{tpu_custom_call.1} parent=11 // pred_region
          %221 = vsyncadd [#allocation5], 0
          %s222 = sshll.u32 %s4, 4
          %s223 = int_to_ptr.hbm [resolvable:$true] %s222
          %s224 = sshll.u32 [#allocation6], 4
          %s225 = int_to_ptr.vmem [resolvable:$true] %s224
          %230 = dma.hbm_to_vmem [thread:$0]  %s223, 2048, %s225, [#allocation5], 128, 128, 8
        $region28: #{tpu_custom_call.1} parent=11 // pred_fallthru
          _
        // Predicated region
        $region29: #{tpu_custom_call.1} parent=11 // pred_check
          %p231 = pneg %p145
        $region30: #{tpu_custom_call.1} parent=11 // pred_check_branch
          %233 = sbr.rel (%p231) target = $region32
        $region31: #{tpu_custom_call.1} parent=11 // pred_region
          _
        $region32: #{tpu_custom_call.1} parent=11 // pred_fallthru
          _
      $region12: #{tpu_custom_call.1} parent=5 // pred_fallthru
        _
      %p234 = scmp.lt.s32.totalorder %s14, 2
      // Predicated region
      $region33: #{tpu_custom_call.1} parent=5 // pred_check
        %p235 = pneg %p234
      $region34: #{tpu_custom_call.1} parent=5 // pred_check_branch
        %237 = sbr.rel (%p235) target = $region36
      $region35: #{tpu_custom_call.1} parent=5 // pred_region
        // Predicated region
        $region37: #{tpu_custom_call.1} parent=35 // pred_check
          %p238 = pneg %p34
        $region38: #{tpu_custom_call.1} parent=35 // pred_check_branch
          %240 = sbr.rel (%p238) target = $region40
        $region39: #{tpu_custom_call.1} parent=35 // pred_region
          %s241 = smul.u32 10, %s14
          %s242 = ssub.s32 19, %s241
          %p243 = scmp.lt.s32.totalorder %s242, 10
          %s244 = scalar_select %p243, %s242, 10
          %s245 = smul.u32 8, %s244
          %p246 = scmp.lt.s32.totalorder %s241, 18
          %s247 = scalar_select %p246, %s241, 18
          %s248 = smul.addr %s247, 8
          %s249 = scalar_lea.vmem %s0, %s248
          %s250 = smul.u32 10, %s14
          %s251 = ssub.s32 19, %s250
          %p252 = scmp.lt.s32.totalorder %s251, 10
          %s253 = scalar_select %p252, %s251, 10
          %s254 = smul.u32 8, %s253
        $region40: #{tpu_custom_call.1} parent=35 // pred_fallthru
          _
      $region36: #{tpu_custom_call.1} parent=5 // pred_fallthru
        _
      %p255 = scmp.le.s32.totalorder 1, %s14
      %p256 = scmp.lt.s32.totalorder %s14, 3
      %p257 = pnand %p255, %p256
      %p258 = pneg %p257
      // Predicated region
      $region41: #{tpu_custom_call.1} parent=5 // pred_check
        _
      $region42: #{tpu_custom_call.1} parent=5 // pred_check_branch
        %260 = sbr.rel (%p257) target = $region44
      $region43: #{tpu_custom_call.1} parent=5 // pred_region
        %s261 = ssub.s32 %s14, 1
        // Predicated region
        $region45: #{tpu_custom_call.1} parent=43 // pred_check
          %p262 = pneg %p61
        $region46: #{tpu_custom_call.1} parent=43 // pred_check_branch
          %264 = sbr.rel (%p262) target = $region48
        $region47: #{tpu_custom_call.1} parent=43 // pred_region
          %266 = dma.done [#allocation3], 2048
        $region48: #{tpu_custom_call.1} parent=43 // pred_fallthru
          _
        // Predicated region
        $region49: #{tpu_custom_call.1} parent=43 // pred_check
          %p267 = pneg %p82
        $region50: #{tpu_custom_call.1} parent=43 // pred_check_branch
          %269 = sbr.rel (%p267) target = $region52
        $region51: #{tpu_custom_call.1} parent=43 // pred_region
          %271 = dma.done [#allocation5], 2048
        $region52: #{tpu_custom_call.1} parent=43 // pred_fallthru
          _
        // Predicated region
        $region53: #{tpu_custom_call.1} parent=43 // pred_check
          %p272 = pneg %p124
        $region54: #{tpu_custom_call.1} parent=43 // pred_check_branch
          %274 = sbr.rel (%p272) target = $region56
        $region55: #{tpu_custom_call.1} parent=43 // pred_region
          %276 = dma.done [#allocation5], 2048
        $region56: #{tpu_custom_call.1} parent=43 // pred_fallthru
          _
        %s277 = smul.u32 10, %s19
        %s278 = ssub.s32 19, %s277
        %p279 = scmp.lt.s32.totalorder %s278, 10
        %s280 = scalar_select %p279, %s278, 10
        %s281 = smul.u32 8, %s280
        %p282 = scmp.lt.s32.totalorder %s277, 18
        %s283 = scalar_select %p282, %s277, 18
        %s284 = smul.addr %s283, 8
        %s285 = scalar_lea.vmem %s0, %s284
        %p286 = pneg %p40
        %p287 = pneg %p37
        %p288 = pneg %p61
        %p289 = pneg %p58
        %p290 = pneg %p82
        %p291 = pneg %p79
        %p292 = pneg %p103
        %p293 = pneg %p100
        %p294 = pneg %p124
        %p295 = pneg %p121
        %p296 = pneg %p145
        %p297 = pneg %p142
        %p298 = pneg %p171
        %p299 = pneg %p168
        %s300 = sand.u32 %s158, 1
        %s301 = sand.u32 %s158, 1
        %s302 = smul.addr %s301, 80
        %s303 = scalar_lea.vmem [#allocation7], %s302
        %s304 = smul.u32 10, %s19
        %s305 = ssub.s32 19, %s304
        %p306 = scmp.lt.s32.totalorder %s305, 10
        %s307 = scalar_select %p306, %s305, 10
        %s308 = smul.u32 8, %s307
        %p309 = scmp.lt.s32.totalorder %s304, 18
        %s310 = scalar_select %p309, %s304, 18
        %s311 = smul.addr %s310, 8
        %s312 = scalar_lea.vmem %s0, %s311
        %s313 = smul.u32 10, %s19
        %s314 = ssub.s32 19, %s313
        %p315 = scmp.lt.s32.totalorder %s314, 10
        %s316 = scalar_select %p315, %s314, 10
        %s317 = smul.u32 8, %s316
        %s318 = smul.u32 10, %s19
        %s319 = ssub.s32 19, %s318
        %p320 = scmp.lt.s32.totalorder %s319, 10
        %s321 = scalar_select %p320, %s319, 10
        %s322 = smul.u32 8, %s321
        %v323 = vld [vmem:[%s312] sm:$0xff]
        %v324 = vld [vmem:[%s312 + $0x8] sm:$0xff]
        %v325 = vld [vmem:[%s312 + $0x10] sm:$0xff]
        %v326 = vld [vmem:[%s312 + $0x18] sm:$0xff]
        %v327 = vld [vmem:[%s312 + $0x20] sm:$0xff]
        %v328 = vld [vmem:[%s312 + $0x28] sm:$0xff]
        %v329 = vld [vmem:[%s312 + $0x30] sm:$0xff]
        %v330 = vld [vmem:[%s312 + $0x38] sm:$0xff]
        %v331 = vld [vmem:[%s312 + $0x40] sm:$0xff]
        %v332 = vld [vmem:[%s312 + $0x48] sm:$0xff]
        %v333 = vld [vmem:[#allocation6] sm:$0xff]
        %v334 = vld [vmem:[#allocation6 + $0x8] sm:$0xff]
        %v335 = vld [vmem:[#allocation6 + $0x10] sm:$0xff]
        %v336 = vld [vmem:[#allocation6 + $0x18] sm:$0xff]
        %v337 = vld [vmem:[#allocation6 + $0x20] sm:$0xff]
        %v338 = vld [vmem:[#allocation6 + $0x28] sm:$0xff]
        %v339 = vld [vmem:[#allocation6 + $0x30] sm:$0xff]
        %v340 = vld [vmem:[#allocation6 + $0x38] sm:$0xff]
        %v341 = vld [vmem:[#allocation6 + $0x40] sm:$0xff]
        %v342 = vld [vmem:[#allocation6 + $0x48] sm:$0xff]
        %v343 = vld [vmem:[#allocation6 + $0x50] sm:$0xff]
        %v344 = vld [vmem:[#allocation6 + $0x58] sm:$0xff]
        %v345 = vld [vmem:[#allocation6 + $0x60] sm:$0xff]
        %v346 = vld [vmem:[#allocation6 + $0x68] sm:$0xff]
        %v347 = vld [vmem:[#allocation6 + $0x70] sm:$0xff]
        %v348 = vld [vmem:[#allocation6 + $0x78] sm:$0xff]
        %v349 = vld [vmem:[%s5] sm:$0xff]
        %v350 = vld [vmem:[#allocation2] sm:$0xff]
        %v351 = vld [vmem:[#allocation2 + $0x8] sm:$0xff]
        %v352 = vld [vmem:[#allocation2 + $0x10] sm:$0xff]
        %v353 = vld [vmem:[#allocation2 + $0x18] sm:$0xff]
        %v354 = vld [vmem:[#allocation2 + $0x20] sm:$0xff]
        %v355 = vld [vmem:[#allocation2 + $0x28] sm:$0xff]
        %v356 = vld [vmem:[#allocation2 + $0x30] sm:$0xff]
        %v357 = vld [vmem:[#allocation2 + $0x38] sm:$0xff]
        %v358 = vld [vmem:[#allocation2 + $0x40] sm:$0xff]
        %v359 = vld [vmem:[#allocation2 + $0x48] sm:$0xff]
        %v360 = vld [vmem:[#allocation2 + $0x50] sm:$0xff]
        %v361 = vld [vmem:[#allocation2 + $0x58] sm:$0xff]
        %v362 = vld [vmem:[#allocation2 + $0x60] sm:$0xff]
        %v363 = vld [vmem:[#allocation2 + $0x68] sm:$0xff]
        %v364 = vld [vmem:[#allocation2 + $0x70] sm:$0xff]
        %v365 = vld [vmem:[#allocation2 + $0x78] sm:$0xff]
        %v366 = vperm.slane %v349, 0
        %367 = vmatpush.msra.mxu0 %v365
        %368 = vmatpush.msra.mxu0 %v364
        %369 = vmatpush.msra.mxu0 %v363
        %370 = vmatpush.msra.mxu0 %v362
        %371 = vmatpush.msra.mxu0 %v361
        %372 = vmatpush.msra.mxu0 %v360
        %373 = vmatpush.msra.mxu0 %v359
        %374 = vmatpush.msra.mxu0 %v358
        %375 = vmatpush.msra.mxu0 %v357
        %376 = vmatpush.msra.mxu0 %v356
        %377 = vmatpush.msra.mxu0 %v355
        %378 = vmatpush.msra.mxu0 %v354
        %379 = vmatpush.msra.mxu0 %v353
        %380 = vmatpush.msra.mxu0 %v352
        %381 = vmatpush.msra.mxu0 %v351
        %382 = vmatpush.msra.mxu0 %v350
        %383 = vmatmul.f32.gmra.mxu0 %v323
        %v384 = vpop.f32.mrf.mxu0
        %v385 = vadd.f32 %v366, %v384
        %386 = vmatmul.f32.gmra.mxu0 %v324
        %v387 = vpop.f32.mrf.mxu0
        %v388 = vadd.f32 %v366, %v387
        %389 = vmatmul.f32.gmra.mxu0 %v325
        %v390 = vpop.f32.mrf.mxu0
        %v391 = vadd.f32 %v366, %v390
        %392 = vmatmul.f32.gmra.mxu0 %v326
        %v393 = vpop.f32.mrf.mxu0
        %v394 = vadd.f32 %v366, %v393
        %395 = vmatmul.f32.gmra.mxu0 %v327
        %v396 = vpop.f32.mrf.mxu0
        %v397 = vadd.f32 %v366, %v396
        %398 = vmatmul.f32.gmra.mxu0 %v328
        %v399 = vpop.f32.mrf.mxu0
        %v400 = vadd.f32 %v366, %v399
        %401 = vmatmul.f32.gmra.mxu0 %v329
        %v402 = vpop.f32.mrf.mxu0
        %v403 = vadd.f32 %v366, %v402
        %404 = vmatmul.f32.gmra.mxu0 %v330
        %v405 = vpop.f32.mrf.mxu0
        %v406 = vadd.f32 %v366, %v405
        %407 = vmatmul.f32.gmra.mxu0 %v331
        %v408 = vpop.f32.mrf.mxu0
        %v409 = vadd.f32 %v366, %v408
        %410 = vmatmul.f32.gmra.mxu0 %v332
        %v411 = vpop.f32.mrf.mxu0
        %v412 = vadd.f32 %v366, %v411
        %413 = vdwg.mxu0
        %v414 = vmul.f32 %v385, 0.5
        %v415 = vmul.f32 %v388, 0.5
        %v416 = vmul.f32 %v391, 0.5
        %v417 = vmul.f32 %v394, 0.5
        %v418 = vmul.f32 %v397, 0.5
        %v419 = vmul.f32 %v400, 0.5
        %v420 = vmul.f32 %v403, 0.5
        %v421 = vmul.f32 %v406, 0.5
        %v422 = vmul.f32 %v409, 0.5
        %v423 = vmul.f32 %v412, 0.5
        %v424 = vmul.f32 %v385, 0.70710677
        %v425 = vmul.f32 %v388, 0.70710677
        %v426 = vmul.f32 %v391, 0.70710677
        %v427 = vmul.f32 %v394, 0.70710677
        %v428 = vmul.f32 %v397, 0.70710677
        %v429 = vmul.f32 %v400, 0.70710677
        %v430 = vmul.f32 %v403, 0.70710677
        %v431 = vmul.f32 %v406, 0.70710677
        %v432 = vmul.f32 %v409, 0.70710677
        %v433 = vmul.f32 %v412, 0.70710677
        %v434 = vmul.f32 %v424, %v424
        %v435 = vmin.f32 16.0, %v434
        %v436 = vmul.f32 %v435, 2.1237322e-06
        %v437 = vadd.f32 %v436, 0.00028619796
        %v438 = vmul.f32 %v435, %v437
        %v439 = vadd.f32 %v438, 0.0036580483
        %v440 = vmul.f32 %v435, %v439
        %v441 = vadd.f32 %v440, 0.05243302
        %v442 = vmul.f32 %v435, %v441
        %v443 = vadd.f32 %v442, 0.18741608
        %v444 = vmul.f32 %v435, %v443
        %v445 = vadd.f32 %v444, 1.1283791
        %v446 = vmul.f32 %v424, %v445
        %v447 = vmul.f32 %v435, 3.8918573e-05
        %v448 = vadd.f32 %v447, 0.001143296
        %v449 = vmul.f32 %v435, %v448
        %v450 = vadd.f32 %v449, 0.014752088
        %v451 = vmul.f32 %v435, %v450
        %v452 = vadd.f32 %v451, 0.112945676
        %v453 = vmul.f32 %v435, %v452
        %v454 = vadd.f32 %v453, 0.4994258
        %v455 = vmul.f32 %v435, %v454
        %v456 = vadd.f32 %v455, 1.0
        %v457 = vrcp.pop %v456
        %v458 = vmul.f32 %v456, %v457
        %v459 = vsub.f32 1.0, %v458
        %v460 = vmul.f32 %v457, %v459
        %v461 = vadd.f32 %v457, %v460
        %vm462 = vweird.f32 %v456
        %vm463 = vweird.f32 %v457
        %vm464 = vmor %vm462, %vm463
        %v465 = vsel %vm464, %v457, %v461
        %v466 = vand.u32 2147483647, %v456
        %vm467 = vcmp.eq.f32.partialorder %v466, 8.507059e+37
        %v468 = vand.u32 %v456, 2147483648
        %v469 = vor.u32 1.1754944e-38, %v468
        %v470 = vsel %vm467, %v469, %v465
        %v471 = vmul.f32 %v446, %v470
        %v472 = vmin.f32 %v471, 1.0
        %v473 = vmax.f32 %v472, -1.0
        %v474 = vmul.f32 %v425, %v425
        %v475 = vmin.f32 16.0, %v474
        %v476 = vmul.f32 %v475, 2.1237322e-06
        %v477 = vadd.f32 %v476, 0.00028619796
        %v478 = vmul.f32 %v475, %v477
        %v479 = vadd.f32 %v478, 0.0036580483
        %v480 = vmul.f32 %v475, %v479
        %v481 = vadd.f32 %v480, 0.05243302
        %v482 = vmul.f32 %v475, %v481
        %v483 = vadd.f32 %v482, 0.18741608
        %v484 = vmul.f32 %v475, %v483
        %v485 = vadd.f32 %v484, 1.1283791
        %v486 = vmul.f32 %v425, %v485
        %v487 = vmul.f32 %v475, 3.8918573e-05
        %v488 = vadd.f32 %v487, 0.001143296
        %v489 = vmul.f32 %v475, %v488
        %v490 = vadd.f32 %v489, 0.014752088
        %v491 = vmul.f32 %v475, %v490
        %v492 = vadd.f32 %v491, 0.112945676
        %v493 = vmul.f32 %v475, %v492
        %v494 = vadd.f32 %v493, 0.4994258
        %v495 = vmul.f32 %v475, %v494
        %v496 = vadd.f32 %v495, 1.0
        %v497 = vrcp.pop %v496
        %v498 = vmul.f32 %v496, %v497
        %v499 = vsub.f32 1.0, %v498
        %v500 = vmul.f32 %v497, %v499
        %v501 = vadd.f32 %v497, %v500
        %vm502 = vweird.f32 %v496
        %vm503 = vweird.f32 %v497
        %vm504 = vmor %vm502, %vm503
        %v505 = vsel %vm504, %v497, %v501
        %v506 = vand.u32 2147483647, %v496
        %vm507 = vcmp.eq.f32.partialorder %v506, 8.507059e+37
        %v508 = vand.u32 %v496, 2147483648
        %v509 = vor.u32 1.1754944e-38, %v508
        %v510 = vsel %vm507, %v509, %v505
        %v511 = vmul.f32 %v486, %v510
        %v512 = vmin.f32 %v511, 1.0
        %v513 = vmax.f32 %v512, -1.0
        %v514 = vmul.f32 %v426, %v426
        %v515 = vmin.f32 16.0, %v514
        %v516 = vmul.f32 %v515, 2.1237322e-06
        %v517 = vadd.f32 %v516, 0.00028619796
        %v518 = vmul.f32 %v515, %v517
        %v519 = vadd.f32 %v518, 0.0036580483
        %v520 = vmul.f32 %v515, %v519
        %v521 = vadd.f32 %v520, 0.05243302
        %v522 = vmul.f32 %v515, %v521
        %v523 = vadd.f32 %v522, 0.18741608
        %v524 = vmul.f32 %v515, %v523
        %v525 = vadd.f32 %v524, 1.1283791
        %v526 = vmul.f32 %v426, %v525
        %v527 = vmul.f32 %v515, 3.8918573e-05
        %v528 = vadd.f32 %v527, 0.001143296
        %v529 = vmul.f32 %v515, %v528
        %v530 = vadd.f32 %v529, 0.014752088
        %v531 = vmul.f32 %v515, %v530
        %v532 = vadd.f32 %v531, 0.112945676
        %v533 = vmul.f32 %v515, %v532
        %v534 = vadd.f32 %v533, 0.4994258
        %v535 = vmul.f32 %v515, %v534
        %v536 = vadd.f32 %v535, 1.0
        %v537 = vrcp.pop %v536
        %v538 = vmul.f32 %v536, %v537
        %v539 = vsub.f32 1.0, %v538
        %v540 = vmul.f32 %v537, %v539
        %v541 = vadd.f32 %v537, %v540
        %vm542 = vweird.f32 %v536
        %vm543 = vweird.f32 %v537
        %vm544 = vmor %vm542, %vm543
        %v545 = vsel %vm544, %v537, %v541
        %v546 = vand.u32 2147483647, %v536
        %vm547 = vcmp.eq.f32.partialorder %v546, 8.507059e+37
        %v548 = vand.u32 %v536, 2147483648
        %v549 = vor.u32 1.1754944e-38, %v548
        %v550 = vsel %vm547, %v549, %v545
        %v551 = vmul.f32 %v526, %v550
        %v552 = vmin.f32 %v551, 1.0
        %v553 = vmax.f32 %v552, -1.0
        %v554 = vmul.f32 %v427, %v427
        %v555 = vmin.f32 16.0, %v554
        %v556 = vmul.f32 %v555, 2.1237322e-06
        %v557 = vadd.f32 %v556, 0.00028619796
        %v558 = vmul.f32 %v555, %v557
        %v559 = vadd.f32 %v558, 0.0036580483
        %v560 = vmul.f32 %v555, %v559
        %v561 = vadd.f32 %v560, 0.05243302
        %v562 = vmul.f32 %v555, %v561
        %v563 = vadd.f32 %v562, 0.18741608
        %v564 = vmul.f32 %v555, %v563
        %v565 = vadd.f32 %v564, 1.1283791
        %v566 = vmul.f32 %v427, %v565
        %v567 = vmul.f32 %v555, 3.8918573e-05
        %v568 = vadd.f32 %v567, 0.001143296
        %v569 = vmul.f32 %v555, %v568
        %v570 = vadd.f32 %v569, 0.014752088
        %v571 = vmul.f32 %v555, %v570
        %v572 = vadd.f32 %v571, 0.112945676
        %v573 = vmul.f32 %v555, %v572
        %v574 = vadd.f32 %v573, 0.4994258
        %v575 = vmul.f32 %v555, %v574
        %v576 = vadd.f32 %v575, 1.0
        %v577 = vrcp.pop %v576
        %v578 = vmul.f32 %v576, %v577
        %v579 = vsub.f32 1.0, %v578
        %v580 = vmul.f32 %v577, %v579
        %v581 = vadd.f32 %v577, %v580
        %vm582 = vweird.f32 %v576
        %vm583 = vweird.f32 %v577
        %vm584 = vmor %vm582, %vm583
        %v585 = vsel %vm584, %v577, %v581
        %v586 = vand.u32 2147483647, %v576
        %vm587 = vcmp.eq.f32.partialorder %v586, 8.507059e+37
        %v588 = vand.u32 %v576, 2147483648
        %v589 = vor.u32 1.1754944e-38, %v588
        %v590 = vsel %vm587, %v589, %v585
        %v591 = vmul.f32 %v566, %v590
        %v592 = vmin.f32 %v591, 1.0
        %v593 = vmax.f32 %v592, -1.0
        %v594 = vmul.f32 %v428, %v428
        %v595 = vmin.f32 16.0, %v594
        %v596 = vmul.f32 %v595, 2.1237322e-06
        %v597 = vadd.f32 %v596, 0.00028619796
        %v598 = vmul.f32 %v595, %v597
        %v599 = vadd.f32 %v598, 0.0036580483
        %v600 = vmul.f32 %v595, %v599
        %v601 = vadd.f32 %v600, 0.05243302
        %v602 = vmul.f32 %v595, %v601
        %v603 = vadd.f32 %v602, 0.18741608
        %v604 = vmul.f32 %v595, %v603
        %v605 = vadd.f32 %v604, 1.1283791
        %v606 = vmul.f32 %v428, %v605
        %v607 = vmul.f32 %v595, 3.8918573e-05
        %v608 = vadd.f32 %v607, 0.001143296
        %v609 = vmul.f32 %v595, %v608
        %v610 = vadd.f32 %v609, 0.014752088
        %v611 = vmul.f32 %v595, %v610
        %v612 = vadd.f32 %v611, 0.112945676
        %v613 = vmul.f32 %v595, %v612
        %v614 = vadd.f32 %v613, 0.4994258
        %v615 = vmul.f32 %v595, %v614
        %v616 = vadd.f32 %v615, 1.0
        %v617 = vrcp.pop %v616
        %v618 = vmul.f32 %v616, %v617
        %v619 = vsub.f32 1.0, %v618
        %v620 = vmul.f32 %v617, %v619
        %v621 = vadd.f32 %v617, %v620
        %vm622 = vweird.f32 %v616
        %vm623 = vweird.f32 %v617
        %vm624 = vmor %vm622, %vm623
        %v625 = vsel %vm624, %v617, %v621
        %v626 = vand.u32 2147483647, %v616
        %vm627 = vcmp.eq.f32.partialorder %v626, 8.507059e+37
        %v628 = vand.u32 %v616, 2147483648
        %v629 = vor.u32 1.1754944e-38, %v628
        %v630 = vsel %vm627, %v629, %v625
        %v631 = vmul.f32 %v606, %v630
        %v632 = vmin.f32 %v631, 1.0
        %v633 = vmax.f32 %v632, -1.0
        %v634 = vmul.f32 %v429, %v429
        %v635 = vmin.f32 16.0, %v634
        %v636 = vmul.f32 %v635, 2.1237322e-06
        %v637 = vadd.f32 %v636, 0.00028619796
        %v638 = vmul.f32 %v635, %v637
        %v639 = vadd.f32 %v638, 0.0036580483
        %v640 = vmul.f32 %v635, %v639
        %v641 = vadd.f32 %v640, 0.05243302
        %v642 = vmul.f32 %v635, %v641
        %v643 = vadd.f32 %v642, 0.18741608
        %v644 = vmul.f32 %v635, %v643
        %v645 = vadd.f32 %v644, 1.1283791
        %v646 = vmul.f32 %v429, %v645
        %v647 = vmul.f32 %v635, 3.8918573e-05
        %v648 = vadd.f32 %v647, 0.001143296
        %v649 = vmul.f32 %v635, %v648
        %v650 = vadd.f32 %v649, 0.014752088
        %v651 = vmul.f32 %v635, %v650
        %v652 = vadd.f32 %v651, 0.112945676
        %v653 = vmul.f32 %v635, %v652
        %v654 = vadd.f32 %v653, 0.4994258
        %v655 = vmul.f32 %v635, %v654
        %v656 = vadd.f32 %v655, 1.0
        %v657 = vrcp.pop %v656
        %v658 = vmul.f32 %v656, %v657
        %v659 = vsub.f32 1.0, %v658
        %v660 = vmul.f32 %v657, %v659
        %v661 = vadd.f32 %v657, %v660
        %vm662 = vweird.f32 %v656
        %vm663 = vweird.f32 %v657
        %vm664 = vmor %vm662, %vm663
        %v665 = vsel %vm664, %v657, %v661
        %v666 = vand.u32 2147483647, %v656
        %vm667 = vcmp.eq.f32.partialorder %v666, 8.507059e+37
        %v668 = vand.u32 %v656, 2147483648
        %v669 = vor.u32 1.1754944e-38, %v668
        %v670 = vsel %vm667, %v669, %v665
        %v671 = vmul.f32 %v646, %v670
        %v672 = vmin.f32 %v671, 1.0
        %v673 = vmax.f32 %v672, -1.0
        %v674 = vmul.f32 %v430, %v430
        %v675 = vmin.f32 16.0, %v674
        %v676 = vmul.f32 %v675, 2.1237322e-06
        %v677 = vadd.f32 %v676, 0.00028619796
        %v678 = vmul.f32 %v675, %v677
        %v679 = vadd.f32 %v678, 0.0036580483
        %v680 = vmul.f32 %v675, %v679
        %v681 = vadd.f32 %v680, 0.05243302
        %v682 = vmul.f32 %v675, %v681
        %v683 = vadd.f32 %v682, 0.18741608
        %v684 = vmul.f32 %v675, %v683
        %v685 = vadd.f32 %v684, 1.1283791
        %v686 = vmul.f32 %v430, %v685
        %v687 = vmul.f32 %v675, 3.8918573e-05
        %v688 = vadd.f32 %v687, 0.001143296
        %v689 = vmul.f32 %v675, %v688
        %v690 = vadd.f32 %v689, 0.014752088
        %v691 = vmul.f32 %v675, %v690
        %v692 = vadd.f32 %v691, 0.112945676
        %v693 = vmul.f32 %v675, %v692
        %v694 = vadd.f32 %v693, 0.4994258
        %v695 = vmul.f32 %v675, %v694
        %v696 = vadd.f32 %v695, 1.0
        %v697 = vrcp.pop %v696
        %v698 = vmul.f32 %v696, %v697
        %v699 = vsub.f32 1.0, %v698
        %v700 = vmul.f32 %v697, %v699
        %v701 = vadd.f32 %v697, %v700
        %vm702 = vweird.f32 %v696
        %vm703 = vweird.f32 %v697
        %vm704 = vmor %vm702, %vm703
        %v705 = vsel %vm704, %v697, %v701
        %v706 = vand.u32 2147483647, %v696
        %vm707 = vcmp.eq.f32.partialorder %v706, 8.507059e+37
        %v708 = vand.u32 %v696, 2147483648
        %v709 = vor.u32 1.1754944e-38, %v708
        %v710 = vsel %vm707, %v709, %v705
        %v711 = vmul.f32 %v686, %v710
        %v712 = vmin.f32 %v711, 1.0
        %v713 = vmax.f32 %v712, -1.0
        %v714 = vmul.f32 %v431, %v431
        %v715 = vmin.f32 16.0, %v714
        %v716 = vmul.f32 %v715, 2.1237322e-06
        %v717 = vadd.f32 %v716, 0.00028619796
        %v718 = vmul.f32 %v715, %v717
        %v719 = vadd.f32 %v718, 0.0036580483
        %v720 = vmul.f32 %v715, %v719
        %v721 = vadd.f32 %v720, 0.05243302
        %v722 = vmul.f32 %v715, %v721
        %v723 = vadd.f32 %v722, 0.18741608
        %v724 = vmul.f32 %v715, %v723
        %v725 = vadd.f32 %v724, 1.1283791
        %v726 = vmul.f32 %v431, %v725
        %v727 = vmul.f32 %v715, 3.8918573e-05
        %v728 = vadd.f32 %v727, 0.001143296
        %v729 = vmul.f32 %v715, %v728
        %v730 = vadd.f32 %v729, 0.014752088
        %v731 = vmul.f32 %v715, %v730
        %v732 = vadd.f32 %v731, 0.112945676
        %v733 = vmul.f32 %v715, %v732
        %v734 = vadd.f32 %v733, 0.4994258
        %v735 = vmul.f32 %v715, %v734
        %v736 = vadd.f32 %v735, 1.0
        %v737 = vrcp.pop %v736
        %v738 = vmul.f32 %v736, %v737
        %v739 = vsub.f32 1.0, %v738
        %v740 = vmul.f32 %v737, %v739
        %v741 = vadd.f32 %v737, %v740
        %vm742 = vweird.f32 %v736
        %vm743 = vweird.f32 %v737
        %vm744 = vmor %vm742, %vm743
        %v745 = vsel %vm744, %v737, %v741
        %v746 = vand.u32 2147483647, %v736
        %vm747 = vcmp.eq.f32.partialorder %v746, 8.507059e+37
        %v748 = vand.u32 %v736, 2147483648
        %v749 = vor.u32 1.1754944e-38, %v748
        %v750 = vsel %vm747, %v749, %v745
        %v751 = vmul.f32 %v726, %v750
        %v752 = vmin.f32 %v751, 1.0
        %v753 = vmax.f32 %v752, -1.0
        %v754 = vmul.f32 %v432, %v432
        %v755 = vmin.f32 16.0, %v754
        %v756 = vmul.f32 %v755, 2.1237322e-06
        %v757 = vadd.f32 %v756, 0.00028619796
        %v758 = vmul.f32 %v755, %v757
        %v759 = vadd.f32 %v758, 0.0036580483
        %v760 = vmul.f32 %v755, %v759
        %v761 = vadd.f32 %v760, 0.05243302
        %v762 = vmul.f32 %v755, %v761
        %v763 = vadd.f32 %v762, 0.18741608
        %v764 = vmul.f32 %v755, %v763
        %v765 = vadd.f32 %v764, 1.1283791
        %v766 = vmul.f32 %v432, %v765
        %v767 = vmul.f32 %v755, 3.8918573e-05
        %v768 = vadd.f32 %v767, 0.001143296
        %v769 = vmul.f32 %v755, %v768
        %v770 = vadd.f32 %v769, 0.014752088
        %v771 = vmul.f32 %v755, %v770
        %v772 = vadd.f32 %v771, 0.112945676
        %v773 = vmul.f32 %v755, %v772
        %v774 = vadd.f32 %v773, 0.4994258
        %v775 = vmul.f32 %v755, %v774
        %v776 = vadd.f32 %v775, 1.0
        %v777 = vrcp.pop %v776
        %v778 = vmul.f32 %v776, %v777
        %v779 = vsub.f32 1.0, %v778
        %v780 = vmul.f32 %v777, %v779
        %v781 = vadd.f32 %v777, %v780
        %vm782 = vweird.f32 %v776
        %vm783 = vweird.f32 %v777
        %vm784 = vmor %vm782, %vm783
        %v785 = vsel %vm784, %v777, %v781
        %v786 = vand.u32 2147483647, %v776
        %vm787 = vcmp.eq.f32.partialorder %v786, 8.507059e+37
        %v788 = vand.u32 %v776, 2147483648
        %v789 = vor.u32 1.1754944e-38, %v788
        %v790 = vsel %vm787, %v789, %v785
        %v791 = vmul.f32 %v766, %v790
        %v792 = vmin.f32 %v791, 1.0
        %v793 = vmax.f32 %v792, -1.0
        %v794 = vmul.f32 %v433, %v433
        %v795 = vmin.f32 16.0, %v794
        %v796 = vmul.f32 %v795, 2.1237322e-06
        %v797 = vadd.f32 %v796, 0.00028619796
        %v798 = vmul.f32 %v795, %v797
        %v799 = vadd.f32 %v798, 0.0036580483
        %v800 = vmul.f32 %v795, %v799
        %v801 = vadd.f32 %v800, 0.05243302
        %v802 = vmul.f32 %v795, %v801
        %v803 = vadd.f32 %v802, 0.18741608
        %v804 = vmul.f32 %v795, %v803
        %v805 = vadd.f32 %v804, 1.1283791
        %v806 = vmul.f32 %v433, %v805
        %v807 = vmul.f32 %v795, 3.8918573e-05
        %v808 = vadd.f32 %v807, 0.001143296
        %v809 = vmul.f32 %v795, %v808
        %v810 = vadd.f32 %v809, 0.014752088
        %v811 = vmul.f32 %v795, %v810
        %v812 = vadd.f32 %v811, 0.112945676
        %v813 = vmul.f32 %v795, %v812
        %v814 = vadd.f32 %v813, 0.4994258
        %v815 = vmul.f32 %v795, %v814
        %v816 = vadd.f32 %v815, 1.0
        %v817 = vrcp.pop %v816
        %v818 = vmul.f32 %v816, %v817
        %v819 = vsub.f32 1.0, %v818
        %v820 = vmul.f32 %v817, %v819
        %v821 = vadd.f32 %v817, %v820
        %vm822 = vweird.f32 %v816
        %vm823 = vweird.f32 %v817
        %vm824 = vmor %vm822, %vm823
        %v825 = vsel %vm824, %v817, %v821
        %v826 = vand.u32 2147483647, %v816
        %vm827 = vcmp.eq.f32.partialorder %v826, 8.507059e+37
        %v828 = vand.u32 %v816, 2147483648
        %v829 = vor.u32 1.1754944e-38, %v828
        %v830 = vsel %vm827, %v829, %v825
        %v831 = vmul.f32 %v806, %v830
        %v832 = vmin.f32 %v831, 1.0
        %v833 = vmax.f32 %v832, -1.0
        %v834 = vadd.f32 %v473, 1.0
        %v835 = vadd.f32 %v513, 1.0
        %v836 = vadd.f32 %v553, 1.0
        %v837 = vadd.f32 %v593, 1.0
        %v838 = vadd.f32 %v633, 1.0
        %v839 = vadd.f32 %v673, 1.0
        %v840 = vadd.f32 %v713, 1.0
        %v841 = vadd.f32 %v753, 1.0
        %v842 = vadd.f32 %v793, 1.0
        %v843 = vadd.f32 %v833, 1.0
        %v844 = vmul.f32 %v414, %v834
        %v845 = vmul.f32 %v415, %v835
        %v846 = vmul.f32 %v416, %v836
        %v847 = vmul.f32 %v417, %v837
        %v848 = vmul.f32 %v418, %v838
        %v849 = vmul.f32 %v419, %v839
        %v850 = vmul.f32 %v420, %v840
        %v851 = vmul.f32 %v421, %v841
        %v852 = vmul.f32 %v422, %v842
        %v853 = vmul.f32 %v423, %v843
        %854 = vmatpush.msra.mxu0 %v348
        %855 = vmatpush.msra.mxu0 %v347
        %856 = vmatpush.msra.mxu0 %v346
        %857 = vmatpush.msra.mxu0 %v345
        %858 = vmatpush.msra.mxu0 %v344
        %859 = vmatpush.msra.mxu0 %v343
        %860 = vmatpush.msra.mxu0 %v342
        %861 = vmatpush.msra.mxu0 %v341
        %862 = vmatpush.msra.mxu0 %v340
        %863 = vmatpush.msra.mxu0 %v339
        %864 = vmatpush.msra.mxu0 %v338
        %865 = vmatpush.msra.mxu0 %v337
        %866 = vmatpush.msra.mxu0 %v336
        %867 = vmatpush.msra.mxu0 %v335
        %868 = vmatpush.msra.mxu0 %v334
        %869 = vmatpush.msra.mxu0 %v333
        %870 = vmatmul.f32.gmra.mxu0 %v844
        %v871 = vpop.f32.mrf.mxu0
        %v872 = vadd.f32 0.0, %v871
        %873 = vmatmul.f32.gmra.mxu0 %v845
        %v874 = vpop.f32.mrf.mxu0
        %v875 = vadd.f32 0.0, %v874
        %876 = vmatmul.f32.gmra.mxu0 %v846
        %v877 = vpop.f32.mrf.mxu0
        %v878 = vadd.f32 0.0, %v877
        %879 = vmatmul.f32.gmra.mxu0 %v847
        %v880 = vpop.f32.mrf.mxu0
        %v881 = vadd.f32 0.0, %v880
        %882 = vmatmul.f32.gmra.mxu0 %v848
        %v883 = vpop.f32.mrf.mxu0
        %v884 = vadd.f32 0.0, %v883
        %885 = vmatmul.f32.gmra.mxu0 %v849
        %v886 = vpop.f32.mrf.mxu0
        %v887 = vadd.f32 0.0, %v886
        %888 = vmatmul.f32.gmra.mxu0 %v850
        %v889 = vpop.f32.mrf.mxu0
        %v890 = vadd.f32 0.0, %v889
        %891 = vmatmul.f32.gmra.mxu0 %v851
        %v892 = vpop.f32.mrf.mxu0
        %v893 = vadd.f32 0.0, %v892
        %894 = vmatmul.f32.gmra.mxu0 %v852
        %v895 = vpop.f32.mrf.mxu0
        %v896 = vadd.f32 0.0, %v895
        %897 = vmatmul.f32.gmra.mxu0 %v853
        %v898 = vpop.f32.mrf.mxu0
        %v899 = vadd.f32 0.0, %v898
        %900 = vdwg.mxu0
        %v901 = vmul.f32 %v872, 0.03125
        %v902 = vmul.f32 %v875, 0.03125
        %v903 = vmul.f32 %v878, 0.03125
        %v904 = vmul.f32 %v881, 0.03125
        %v905 = vmul.f32 %v884, 0.03125
        %v906 = vmul.f32 %v887, 0.03125
        %v907 = vmul.f32 %v890, 0.03125
        %v908 = vmul.f32 %v893, 0.03125
        %v909 = vmul.f32 %v896, 0.03125
        %v910 = vmul.f32 %v899, 0.03125
        %v911 = vsub.f32 %v844, %v901
        %v912 = vsub.f32 %v845, %v902
        %v913 = vsub.f32 %v846, %v903
        %v914 = vsub.f32 %v847, %v904
        %v915 = vsub.f32 %v848, %v905
        %v916 = vsub.f32 %v849, %v906
        %v917 = vsub.f32 %v850, %v907
        %v918 = vsub.f32 %v851, %v908
        %v919 = vsub.f32 %v852, %v909
        %v920 = vsub.f32 %v853, %v910
        %v921 = vmul.f32 %v911, %v911
        %v922 = vmul.f32 %v912, %v912
        %v923 = vmul.f32 %v913, %v913
        %v924 = vmul.f32 %v914, %v914
        %v925 = vmul.f32 %v915, %v915
        %v926 = vmul.f32 %v916, %v916
        %v927 = vmul.f32 %v917, %v917
        %v928 = vmul.f32 %v918, %v918
        %v929 = vmul.f32 %v919, %v919
        %v930 = vmul.f32 %v920, %v920
        %931 = vmatpush.msra.mxu0 %v348
        %932 = vmatpush.msra.mxu0 %v347
        %933 = vmatpush.msra.mxu0 %v346
        %934 = vmatpush.msra.mxu0 %v345
        %935 = vmatpush.msra.mxu0 %v344
        %936 = vmatpush.msra.mxu0 %v343
        %937 = vmatpush.msra.mxu0 %v342
        %938 = vmatpush.msra.mxu0 %v341
        %939 = vmatpush.msra.mxu0 %v340
        %940 = vmatpush.msra.mxu0 %v339
        %941 = vmatpush.msra.mxu0 %v338
        %942 = vmatpush.msra.mxu0 %v337
        %943 = vmatpush.msra.mxu0 %v336
        %944 = vmatpush.msra.mxu0 %v335
        %945 = vmatpush.msra.mxu0 %v334
        %946 = vmatpush.msra.mxu0 %v333
        %947 = vmatmul.f32.gmra.mxu0 %v921
        %v948 = vpop.f32.mrf.mxu0
        %v949 = vadd.f32 0.0, %v948
        %950 = vmatmul.f32.gmra.mxu0 %v922
        %v951 = vpop.f32.mrf.mxu0
        %v952 = vadd.f32 0.0, %v951
        %953 = vmatmul.f32.gmra.mxu0 %v923
        %v954 = vpop.f32.mrf.mxu0
        %v955 = vadd.f32 0.0, %v954
        %956 = vmatmul.f32.gmra.mxu0 %v924
        %v957 = vpop.f32.mrf.mxu0
        %v958 = vadd.f32 0.0, %v957
        %959 = vmatmul.f32.gmra.mxu0 %v925
        %v960 = vpop.f32.mrf.mxu0
        %v961 = vadd.f32 0.0, %v960
        %962 = vmatmul.f32.gmra.mxu0 %v926
        %v963 = vpop.f32.mrf.mxu0
        %v964 = vadd.f32 0.0, %v963
        %965 = vmatmul.f32.gmra.mxu0 %v927
        %v966 = vpop.f32.mrf.mxu0
        %v967 = vadd.f32 0.0, %v966
        %968 = vmatmul.f32.gmra.mxu0 %v928
        %v969 = vpop.f32.mrf.mxu0
        %v970 = vadd.f32 0.0, %v969
        %971 = vmatmul.f32.gmra.mxu0 %v929
        %v972 = vpop.f32.mrf.mxu0
        %v973 = vadd.f32 0.0, %v972
        %974 = vmatmul.f32.gmra.mxu0 %v930
        %v975 = vpop.f32.mrf.mxu0
        %v976 = vadd.f32 0.0, %v975
        %977 = vdwg.mxu0
        %v978 = vmul.f32 %v949, 0.03125
        %v979 = vmul.f32 %v952, 0.03125
        %v980 = vmul.f32 %v955, 0.03125
        %v981 = vmul.f32 %v958, 0.03125
        %v982 = vmul.f32 %v961, 0.03125
        %v983 = vmul.f32 %v964, 0.03125
        %v984 = vmul.f32 %v967, 0.03125
        %v985 = vmul.f32 %v970, 0.03125
        %v986 = vmul.f32 %v973, 0.03125
        %v987 = vmul.f32 %v976, 0.03125
        %v988 = vadd.f32 %v978, 1e-05
        %v989 = vadd.f32 %v979, 1e-05
        %v990 = vadd.f32 %v980, 1e-05
        %v991 = vadd.f32 %v981, 1e-05
        %v992 = vadd.f32 %v982, 1e-05
        %v993 = vadd.f32 %v983, 1e-05
        %v994 = vadd.f32 %v984, 1e-05
        %v995 = vadd.f32 %v985, 1e-05
        %v996 = vadd.f32 %v986, 1e-05
        %v997 = vadd.f32 %v987, 1e-05
        %v998 = vrsqrt.pop %v988
        %v999 = vmul.f32 %v998, %v988
        %v1000 = vmul.f32 %v999, %v998
        %v1001 = vmul.f32 0.5, %v1000
        %v1002 = vsub.f32 1.5, %v1001
        %v1003 = vmul.f32 %v998, %v1002
        %vm1004 = vweird.f32 %v988
        %vm1005 = vweird.f32 %v998
        %vm1006 = vmor %vm1004, %vm1005
        %v1007 = vsel %vm1006, %v998, %v1003
        %v1008 = vrsqrt.pop %v989
        %v1009 = vmul.f32 %v1008, %v989
        %v1010 = vmul.f32 %v1009, %v1008
        %v1011 = vmul.f32 0.5, %v1010
        %v1012 = vsub.f32 1.5, %v1011
        %v1013 = vmul.f32 %v1008, %v1012
        %vm1014 = vweird.f32 %v989
        %vm1015 = vweird.f32 %v1008
        %vm1016 = vmor %vm1014, %vm1015
        %v1017 = vsel %vm1016, %v1008, %v1013
        %v1018 = vrsqrt.pop %v990
        %v1019 = vmul.f32 %v1018, %v990
        %v1020 = vmul.f32 %v1019, %v1018
        %v1021 = vmul.f32 0.5, %v1020
        %v1022 = vsub.f32 1.5, %v1021
        %v1023 = vmul.f32 %v1018, %v1022
        %vm1024 = vweird.f32 %v990
        %vm1025 = vweird.f32 %v1018
        %vm1026 = vmor %vm1024, %vm1025
        %v1027 = vsel %vm1026, %v1018, %v1023
        %v1028 = vrsqrt.pop %v991
        %v1029 = vmul.f32 %v1028, %v991
        %v1030 = vmul.f32 %v1029, %v1028
        %v1031 = vmul.f32 0.5, %v1030
        %v1032 = vsub.f32 1.5, %v1031
        %v1033 = vmul.f32 %v1028, %v1032
        %vm1034 = vweird.f32 %v991
        %vm1035 = vweird.f32 %v1028
        %vm1036 = vmor %vm1034, %vm1035
        %v1037 = vsel %vm1036, %v1028, %v1033
        %v1038 = vrsqrt.pop %v992
        %v1039 = vmul.f32 %v1038, %v992
        %v1040 = vmul.f32 %v1039, %v1038
        %v1041 = vmul.f32 0.5, %v1040
        %v1042 = vsub.f32 1.5, %v1041
        %v1043 = vmul.f32 %v1038, %v1042
        %vm1044 = vweird.f32 %v992
        %vm1045 = vweird.f32 %v1038
        %vm1046 = vmor %vm1044, %vm1045
        %v1047 = vsel %vm1046, %v1038, %v1043
        %v1048 = vrsqrt.pop %v993
        %v1049 = vmul.f32 %v1048, %v993
        %v1050 = vmul.f32 %v1049, %v1048
        %v1051 = vmul.f32 0.5, %v1050
        %v1052 = vsub.f32 1.5, %v1051
        %v1053 = vmul.f32 %v1048, %v1052
        %vm1054 = vweird.f32 %v993
        %vm1055 = vweird.f32 %v1048
        %vm1056 = vmor %vm1054, %vm1055
        %v1057 = vsel %vm1056, %v1048, %v1053
        %v1058 = vrsqrt.pop %v994
        %v1059 = vmul.f32 %v1058, %v994
        %v1060 = vmul.f32 %v1059, %v1058
        %v1061 = vmul.f32 0.5, %v1060
        %v1062 = vsub.f32 1.5, %v1061
        %v1063 = vmul.f32 %v1058, %v1062
        %vm1064 = vweird.f32 %v994
        %vm1065 = vweird.f32 %v1058
        %vm1066 = vmor %vm1064, %vm1065
        %v1067 = vsel %vm1066, %v1058, %v1063
        %v1068 = vrsqrt.pop %v995
        %v1069 = vmul.f32 %v1068, %v995
        %v1070 = vmul.f32 %v1069, %v1068
        %v1071 = vmul.f32 0.5, %v1070
        %v1072 = vsub.f32 1.5, %v1071
        %v1073 = vmul.f32 %v1068, %v1072
        %vm1074 = vweird.f32 %v995
        %vm1075 = vweird.f32 %v1068
        %vm1076 = vmor %vm1074, %vm1075
        %v1077 = vsel %vm1076, %v1068, %v1073
        %v1078 = vrsqrt.pop %v996
        %v1079 = vmul.f32 %v1078, %v996
        %v1080 = vmul.f32 %v1079, %v1078
        %v1081 = vmul.f32 0.5, %v1080
        %v1082 = vsub.f32 1.5, %v1081
        %v1083 = vmul.f32 %v1078, %v1082
        %vm1084 = vweird.f32 %v996
        %vm1085 = vweird.f32 %v1078
        %vm1086 = vmor %vm1084, %vm1085
        %v1087 = vsel %vm1086, %v1078, %v1083
        %v1088 = vrsqrt.pop %v997
        %v1089 = vmul.f32 %v1088, %v997
        %v1090 = vmul.f32 %v1089, %v1088
        %v1091 = vmul.f32 0.5, %v1090
        %v1092 = vsub.f32 1.5, %v1091
        %v1093 = vmul.f32 %v1088, %v1092
        %vm1094 = vweird.f32 %v997
        %vm1095 = vweird.f32 %v1088
        %vm1096 = vmor %vm1094, %vm1095
        %v1097 = vsel %vm1096, %v1088, %v1093
        %v1098 = vmul.f32 %v911, %v1007
        %v1099 = vmul.f32 %v912, %v1017
        %v1100 = vmul.f32 %v913, %v1027
        %v1101 = vmul.f32 %v914, %v1037
        %v1102 = vmul.f32 %v915, %v1047
        %v1103 = vmul.f32 %v916, %v1057
        %v1104 = vmul.f32 %v917, %v1067
        %v1105 = vmul.f32 %v918, %v1077
        %v1106 = vmul.f32 %v919, %v1087
        %v1107 = vmul.f32 %v920, %v1097
        %v1108 = vperm.slane %v349, 1
        %v1109 = vmul.f32 %v1098, %v1108
        %v1110 = vmul.f32 %v1099, %v1108
        %v1111 = vmul.f32 %v1100, %v1108
        %v1112 = vmul.f32 %v1101, %v1108
        %v1113 = vmul.f32 %v1102, %v1108
        %v1114 = vmul.f32 %v1103, %v1108
        %v1115 = vmul.f32 %v1104, %v1108
        %v1116 = vmul.f32 %v1105, %v1108
        %v1117 = vmul.f32 %v1106, %v1108
        %v1118 = vmul.f32 %v1107, %v1108
        %v1119 = vperm.slane %v349, 2
        %v1120 = vadd.f32 %v1109, %v1119
        %v1121 = vadd.f32 %v1110, %v1119
        %v1122 = vadd.f32 %v1111, %v1119
        %v1123 = vadd.f32 %v1112, %v1119
        %v1124 = vadd.f32 %v1113, %v1119
        %v1125 = vadd.f32 %v1114, %v1119
        %v1126 = vadd.f32 %v1115, %v1119
        %v1127 = vadd.f32 %v1116, %v1119
        %v1128 = vadd.f32 %v1117, %v1119
        %v1129 = vadd.f32 %v1118, %v1119
        %v1130 = vadd.f32 %v1120, %v385
        %v1131 = vadd.f32 %v1121, %v388
        %v1132 = vadd.f32 %v1122, %v391
        %v1133 = vadd.f32 %v1123, %v394
        %v1134 = vadd.f32 %v1124, %v397
        %v1135 = vadd.f32 %v1125, %v400
        %v1136 = vadd.f32 %v1126, %v403
        %v1137 = vadd.f32 %v1127, %v406
        %v1138 = vadd.f32 %v1128, %v409
        %v1139 = vadd.f32 %v1129, %v412
        %v1140 = vld [vmem:[#allocation4] sm:$0xff]
        %v1141 = vld [vmem:[#allocation4 + $0x8] sm:$0xff]
        %v1142 = vld [vmem:[#allocation4 + $0x10] sm:$0xff]
        %v1143 = vld [vmem:[#allocation4 + $0x18] sm:$0xff]
        %v1144 = vld [vmem:[#allocation4 + $0x20] sm:$0xff]
        %v1145 = vld [vmem:[#allocation4 + $0x28] sm:$0xff]
        %v1146 = vld [vmem:[#allocation4 + $0x30] sm:$0xff]
        %v1147 = vld [vmem:[#allocation4 + $0x38] sm:$0xff]
        %v1148 = vld [vmem:[#allocation4 + $0x40] sm:$0xff]
        %v1149 = vld [vmem:[#allocation4 + $0x48] sm:$0xff]
        %v1150 = vld [vmem:[#allocation4 + $0x50] sm:$0xff]
        %v1151 = vld [vmem:[#allocation4 + $0x58] sm:$0xff]
        %v1152 = vld [vmem:[#allocation4 + $0x60] sm:$0xff]
        %v1153 = vld [vmem:[#allocation4 + $0x68] sm:$0xff]
        %v1154 = vld [vmem:[#allocation4 + $0x70] sm:$0xff]
        %v1155 = vld [vmem:[#allocation4 + $0x78] sm:$0xff]
        %v1156 = vperm.slane %v349, 3
        %1157 = vmatpush.msra.mxu0 %v1155
        %1158 = vmatpush.msra.mxu0 %v1154
        %1159 = vmatpush.msra.mxu0 %v1153
        %1160 = vmatpush.msra.mxu0 %v1152
        %1161 = vmatpush.msra.mxu0 %v1151
        %1162 = vmatpush.msra.mxu0 %v1150
        %1163 = vmatpush.msra.mxu0 %v1149
        %1164 = vmatpush.msra.mxu0 %v1148
        %1165 = vmatpush.msra.mxu0 %v1147
        %1166 = vmatpush.msra.mxu0 %v1146
        %1167 = vmatpush.msra.mxu0 %v1145
        %1168 = vmatpush.msra.mxu0 %v1144
        %1169 = vmatpush.msra.mxu0 %v1143
        %1170 = vmatpush.msra.mxu0 %v1142
        %1171 = vmatpush.msra.mxu0 %v1141
        %1172 = vmatpush.msra.mxu0 %v1140
        %1173 = vmatmul.f32.gmra.mxu0 %v1130
        %v1174 = vpop.f32.mrf.mxu0
        %v1175 = vadd.f32 %v1156, %v1174
        %1176 = vmatmul.f32.gmra.mxu0 %v1131
        %v1177 = vpop.f32.mrf.mxu0
        %v1178 = vadd.f32 %v1156, %v1177
        %1179 = vmatmul.f32.gmra.mxu0 %v1132
        %v1180 = vpop.f32.mrf.mxu0
        %v1181 = vadd.f32 %v1156, %v1180
        %1182 = vmatmul.f32.gmra.mxu0 %v1133
        %v1183 = vpop.f32.mrf.mxu0
        %v1184 = vadd.f32 %v1156, %v1183
        %1185 = vmatmul.f32.gmra.mxu0 %v1134
        %v1186 = vpop.f32.mrf.mxu0
        %v1187 = vadd.f32 %v1156, %v1186
        %1188 = vmatmul.f32.gmra.mxu0 %v1135
        %v1189 = vpop.f32.mrf.mxu0
        %v1190 = vadd.f32 %v1156, %v1189
        %1191 = vmatmul.f32.gmra.mxu0 %v1136
        %v1192 = vpop.f32.mrf.mxu0
        %v1193 = vadd.f32 %v1156, %v1192
        %1194 = vmatmul.f32.gmra.mxu0 %v1137
        %v1195 = vpop.f32.mrf.mxu0
        %v1196 = vadd.f32 %v1156, %v1195
        %1197 = vmatmul.f32.gmra.mxu0 %v1138
        %v1198 = vpop.f32.mrf.mxu0
        %v1199 = vadd.f32 %v1156, %v1198
        %1200 = vmatmul.f32.gmra.mxu0 %v1139
        %v1201 = vpop.f32.mrf.mxu0
        %v1202 = vadd.f32 %v1156, %v1201
        %1203 = vdwg.mxu0
        %v1204 = vmul.f32 %v1175, 0.5
        %v1205 = vmul.f32 %v1178, 0.5
        %v1206 = vmul.f32 %v1181, 0.5
        %v1207 = vmul.f32 %v1184, 0.5
        %v1208 = vmul.f32 %v1187, 0.5
        %v1209 = vmul.f32 %v1190, 0.5
        %v1210 = vmul.f32 %v1193, 0.5
        %v1211 = vmul.f32 %v1196, 0.5
        %v1212 = vmul.f32 %v1199, 0.5
        %v1213 = vmul.f32 %v1202, 0.5
        %v1214 = vmul.f32 %v1175, 0.70710677
        %v1215 = vmul.f32 %v1178, 0.70710677
        %v1216 = vmul.f32 %v1181, 0.70710677
        %v1217 = vmul.f32 %v1184, 0.70710677
        %v1218 = vmul.f32 %v1187, 0.70710677
        %v1219 = vmul.f32 %v1190, 0.70710677
        %v1220 = vmul.f32 %v1193, 0.70710677
        %v1221 = vmul.f32 %v1196, 0.70710677
        %v1222 = vmul.f32 %v1199, 0.70710677
        %v1223 = vmul.f32 %v1202, 0.70710677
        %v1224 = vmul.f32 %v1214, %v1214
        %v1225 = vmin.f32 16.0, %v1224
        %v1226 = vmul.f32 %v1225, 2.1237322e-06
        %v1227 = vadd.f32 %v1226, 0.00028619796
        %v1228 = vmul.f32 %v1225, %v1227
        %v1229 = vadd.f32 %v1228, 0.0036580483
        %v1230 = vmul.f32 %v1225, %v1229
        %v1231 = vadd.f32 %v1230, 0.05243302
        %v1232 = vmul.f32 %v1225, %v1231
        %v1233 = vadd.f32 %v1232, 0.18741608
        %v1234 = vmul.f32 %v1225, %v1233
        %v1235 = vadd.f32 %v1234, 1.1283791
        %v1236 = vmul.f32 %v1214, %v1235
        %v1237 = vmul.f32 %v1225, 3.8918573e-05
        %v1238 = vadd.f32 %v1237, 0.001143296
        %v1239 = vmul.f32 %v1225, %v1238
        %v1240 = vadd.f32 %v1239, 0.014752088
        %v1241 = vmul.f32 %v1225, %v1240
        %v1242 = vadd.f32 %v1241, 0.112945676
        %v1243 = vmul.f32 %v1225, %v1242
        %v1244 = vadd.f32 %v1243, 0.4994258
        %v1245 = vmul.f32 %v1225, %v1244
        %v1246 = vadd.f32 %v1245, 1.0
        %v1247 = vrcp.pop %v1246
        %v1248 = vmul.f32 %v1246, %v1247
        %v1249 = vsub.f32 1.0, %v1248
        %v1250 = vmul.f32 %v1247, %v1249
        %v1251 = vadd.f32 %v1247, %v1250
        %vm1252 = vweird.f32 %v1246
        %vm1253 = vweird.f32 %v1247
        %vm1254 = vmor %vm1252, %vm1253
        %v1255 = vsel %vm1254, %v1247, %v1251
        %v1256 = vand.u32 2147483647, %v1246
        %vm1257 = vcmp.eq.f32.partialorder %v1256, 8.507059e+37
        %v1258 = vand.u32 %v1246, 2147483648
        %v1259 = vor.u32 1.1754944e-38, %v1258
        %v1260 = vsel %vm1257, %v1259, %v1255
        %v1261 = vmul.f32 %v1236, %v1260
        %v1262 = vmin.f32 %v1261, 1.0
        %v1263 = vmax.f32 %v1262, -1.0
        %v1264 = vmul.f32 %v1215, %v1215
        %v1265 = vmin.f32 16.0, %v1264
        %v1266 = vmul.f32 %v1265, 2.1237322e-06
        %v1267 = vadd.f32 %v1266, 0.00028619796
        %v1268 = vmul.f32 %v1265, %v1267
        %v1269 = vadd.f32 %v1268, 0.0036580483
        %v1270 = vmul.f32 %v1265, %v1269
        %v1271 = vadd.f32 %v1270, 0.05243302
        %v1272 = vmul.f32 %v1265, %v1271
        %v1273 = vadd.f32 %v1272, 0.18741608
        %v1274 = vmul.f32 %v1265, %v1273
        %v1275 = vadd.f32 %v1274, 1.1283791
        %v1276 = vmul.f32 %v1215, %v1275
        %v1277 = vmul.f32 %v1265, 3.8918573e-05
        %v1278 = vadd.f32 %v1277, 0.001143296
        %v1279 = vmul.f32 %v1265, %v1278
        %v1280 = vadd.f32 %v1279, 0.014752088
        %v1281 = vmul.f32 %v1265, %v1280
        %v1282 = vadd.f32 %v1281, 0.112945676
        %v1283 = vmul.f32 %v1265, %v1282
        %v1284 = vadd.f32 %v1283, 0.4994258
        %v1285 = vmul.f32 %v1265, %v1284
        %v1286 = vadd.f32 %v1285, 1.0
        %v1287 = vrcp.pop %v1286
        %v1288 = vmul.f32 %v1286, %v1287
        %v1289 = vsub.f32 1.0, %v1288
        %v1290 = vmul.f32 %v1287, %v1289
        %v1291 = vadd.f32 %v1287, %v1290
        %vm1292 = vweird.f32 %v1286
        %vm1293 = vweird.f32 %v1287
        %vm1294 = vmor %vm1292, %vm1293
        %v1295 = vsel %vm1294, %v1287, %v1291
        %v1296 = vand.u32 2147483647, %v1286
        %vm1297 = vcmp.eq.f32.partialorder %v1296, 8.507059e+37
        %v1298 = vand.u32 %v1286, 2147483648
        %v1299 = vor.u32 1.1754944e-38, %v1298
        %v1300 = vsel %vm1297, %v1299, %v1295
        %v1301 = vmul.f32 %v1276, %v1300
        %v1302 = vmin.f32 %v1301, 1.0
        %v1303 = vmax.f32 %v1302, -1.0
        %v1304 = vmul.f32 %v1216, %v1216
        %v1305 = vmin.f32 16.0, %v1304
        %v1306 = vmul.f32 %v1305, 2.1237322e-06
        %v1307 = vadd.f32 %v1306, 0.00028619796
        %v1308 = vmul.f32 %v1305, %v1307
        %v1309 = vadd.f32 %v1308, 0.0036580483
        %v1310 = vmul.f32 %v1305, %v1309
        %v1311 = vadd.f32 %v1310, 0.05243302
        %v1312 = vmul.f32 %v1305, %v1311
        %v1313 = vadd.f32 %v1312, 0.18741608
        %v1314 = vmul.f32 %v1305, %v1313
        %v1315 = vadd.f32 %v1314, 1.1283791
        %v1316 = vmul.f32 %v1216, %v1315
        %v1317 = vmul.f32 %v1305, 3.8918573e-05
        %v1318 = vadd.f32 %v1317, 0.001143296
        %v1319 = vmul.f32 %v1305, %v1318
        %v1320 = vadd.f32 %v1319, 0.014752088
        %v1321 = vmul.f32 %v1305, %v1320
        %v1322 = vadd.f32 %v1321, 0.112945676
        %v1323 = vmul.f32 %v1305, %v1322
        %v1324 = vadd.f32 %v1323, 0.4994258
        %v1325 = vmul.f32 %v1305, %v1324
        %v1326 = vadd.f32 %v1325, 1.0
        %v1327 = vrcp.pop %v1326
        %v1328 = vmul.f32 %v1326, %v1327
        %v1329 = vsub.f32 1.0, %v1328
        %v1330 = vmul.f32 %v1327, %v1329
        %v1331 = vadd.f32 %v1327, %v1330
        %vm1332 = vweird.f32 %v1326
        %vm1333 = vweird.f32 %v1327
        %vm1334 = vmor %vm1332, %vm1333
        %v1335 = vsel %vm1334, %v1327, %v1331
        %v1336 = vand.u32 2147483647, %v1326
        %vm1337 = vcmp.eq.f32.partialorder %v1336, 8.507059e+37
        %v1338 = vand.u32 %v1326, 2147483648
        %v1339 = vor.u32 1.1754944e-38, %v1338
        %v1340 = vsel %vm1337, %v1339, %v1335
        %v1341 = vmul.f32 %v1316, %v1340
        %v1342 = vmin.f32 %v1341, 1.0
        %v1343 = vmax.f32 %v1342, -1.0
        %v1344 = vmul.f32 %v1217, %v1217
        %v1345 = vmin.f32 16.0, %v1344
        %v1346 = vmul.f32 %v1345, 2.1237322e-06
        %v1347 = vadd.f32 %v1346, 0.00028619796
        %v1348 = vmul.f32 %v1345, %v1347
        %v1349 = vadd.f32 %v1348, 0.0036580483
        %v1350 = vmul.f32 %v1345, %v1349
        %v1351 = vadd.f32 %v1350, 0.05243302
        %v1352 = vmul.f32 %v1345, %v1351
        %v1353 = vadd.f32 %v1352, 0.18741608
        %v1354 = vmul.f32 %v1345, %v1353
        %v1355 = vadd.f32 %v1354, 1.1283791
        %v1356 = vmul.f32 %v1217, %v1355
        %v1357 = vmul.f32 %v1345, 3.8918573e-05
        %v1358 = vadd.f32 %v1357, 0.001143296
        %v1359 = vmul.f32 %v1345, %v1358
        %v1360 = vadd.f32 %v1359, 0.014752088
        %v1361 = vmul.f32 %v1345, %v1360
        %v1362 = vadd.f32 %v1361, 0.112945676
        %v1363 = vmul.f32 %v1345, %v1362
        %v1364 = vadd.f32 %v1363, 0.4994258
        %v1365 = vmul.f32 %v1345, %v1364
        %v1366 = vadd.f32 %v1365, 1.0
        %v1367 = vrcp.pop %v1366
        %v1368 = vmul.f32 %v1366, %v1367
        %v1369 = vsub.f32 1.0, %v1368
        %v1370 = vmul.f32 %v1367, %v1369
        %v1371 = vadd.f32 %v1367, %v1370
        %vm1372 = vweird.f32 %v1366
        %vm1373 = vweird.f32 %v1367
        %vm1374 = vmor %vm1372, %vm1373
        %v1375 = vsel %vm1374, %v1367, %v1371
        %v1376 = vand.u32 2147483647, %v1366
        %vm1377 = vcmp.eq.f32.partialorder %v1376, 8.507059e+37
        %v1378 = vand.u32 %v1366, 2147483648
        %v1379 = vor.u32 1.1754944e-38, %v1378
        %v1380 = vsel %vm1377, %v1379, %v1375
        %v1381 = vmul.f32 %v1356, %v1380
        %v1382 = vmin.f32 %v1381, 1.0
        %v1383 = vmax.f32 %v1382, -1.0
        %v1384 = vmul.f32 %v1218, %v1218
        %v1385 = vmin.f32 16.0, %v1384
        %v1386 = vmul.f32 %v1385, 2.1237322e-06
        %v1387 = vadd.f32 %v1386, 0.00028619796
        %v1388 = vmul.f32 %v1385, %v1387
        %v1389 = vadd.f32 %v1388, 0.0036580483
        %v1390 = vmul.f32 %v1385, %v1389
        %v1391 = vadd.f32 %v1390, 0.05243302
        %v1392 = vmul.f32 %v1385, %v1391
        %v1393 = vadd.f32 %v1392, 0.18741608
        %v1394 = vmul.f32 %v1385, %v1393
        %v1395 = vadd.f32 %v1394, 1.1283791
        %v1396 = vmul.f32 %v1218, %v1395
        %v1397 = vmul.f32 %v1385, 3.8918573e-05
        %v1398 = vadd.f32 %v1397, 0.001143296
        %v1399 = vmul.f32 %v1385, %v1398
        %v1400 = vadd.f32 %v1399, 0.014752088
        %v1401 = vmul.f32 %v1385, %v1400
        %v1402 = vadd.f32 %v1401, 0.112945676
        %v1403 = vmul.f32 %v1385, %v1402
        %v1404 = vadd.f32 %v1403, 0.4994258
        %v1405 = vmul.f32 %v1385, %v1404
        %v1406 = vadd.f32 %v1405, 1.0
        %v1407 = vrcp.pop %v1406
        %v1408 = vmul.f32 %v1406, %v1407
        %v1409 = vsub.f32 1.0, %v1408
        %v1410 = vmul.f32 %v1407, %v1409
        %v1411 = vadd.f32 %v1407, %v1410
        %vm1412 = vweird.f32 %v1406
        %vm1413 = vweird.f32 %v1407
        %vm1414 = vmor %vm1412, %vm1413
        %v1415 = vsel %vm1414, %v1407, %v1411
        %v1416 = vand.u32 2147483647, %v1406
        %vm1417 = vcmp.eq.f32.partialorder %v1416, 8.507059e+37
        %v1418 = vand.u32 %v1406, 2147483648
        %v1419 = vor.u32 1.1754944e-38, %v1418
        %v1420 = vsel %vm1417, %v1419, %v1415
        %v1421 = vmul.f32 %v1396, %v1420
        %v1422 = vmin.f32 %v1421, 1.0
        %v1423 = vmax.f32 %v1422, -1.0
        %v1424 = vmul.f32 %v1219, %v1219
        %v1425 = vmin.f32 16.0, %v1424
        %v1426 = vmul.f32 %v1425, 2.1237322e-06
        %v1427 = vadd.f32 %v1426, 0.00028619796
        %v1428 = vmul.f32 %v1425, %v1427
        %v1429 = vadd.f32 %v1428, 0.0036580483
        %v1430 = vmul.f32 %v1425, %v1429
        %v1431 = vadd.f32 %v1430, 0.05243302
        %v1432 = vmul.f32 %v1425, %v1431
        %v1433 = vadd.f32 %v1432, 0.18741608
        %v1434 = vmul.f32 %v1425, %v1433
        %v1435 = vadd.f32 %v1434, 1.1283791
        %v1436 = vmul.f32 %v1219, %v1435
        %v1437 = vmul.f32 %v1425, 3.8918573e-05
        %v1438 = vadd.f32 %v1437, 0.001143296
        %v1439 = vmul.f32 %v1425, %v1438
        %v1440 = vadd.f32 %v1439, 0.014752088
        %v1441 = vmul.f32 %v1425, %v1440
        %v1442 = vadd.f32 %v1441, 0.112945676
        %v1443 = vmul.f32 %v1425, %v1442
        %v1444 = vadd.f32 %v1443, 0.4994258
        %v1445 = vmul.f32 %v1425, %v1444
        %v1446 = vadd.f32 %v1445, 1.0
        %v1447 = vrcp.pop %v1446
        %v1448 = vmul.f32 %v1446, %v1447
        %v1449 = vsub.f32 1.0, %v1448
        %v1450 = vmul.f32 %v1447, %v1449
        %v1451 = vadd.f32 %v1447, %v1450
        %vm1452 = vweird.f32 %v1446
        %vm1453 = vweird.f32 %v1447
        %vm1454 = vmor %vm1452, %vm1453
        %v1455 = vsel %vm1454, %v1447, %v1451
        %v1456 = vand.u32 2147483647, %v1446
        %vm1457 = vcmp.eq.f32.partialorder %v1456, 8.507059e+37
        %v1458 = vand.u32 %v1446, 2147483648
        %v1459 = vor.u32 1.1754944e-38, %v1458
        %v1460 = vsel %vm1457, %v1459, %v1455
        %v1461 = vmul.f32 %v1436, %v1460
        %v1462 = vmin.f32 %v1461, 1.0
        %v1463 = vmax.f32 %v1462, -1.0
        %v1464 = vmul.f32 %v1220, %v1220
        %v1465 = vmin.f32 16.0, %v1464
        %v1466 = vmul.f32 %v1465, 2.1237322e-06
        %v1467 = vadd.f32 %v1466, 0.00028619796
        %v1468 = vmul.f32 %v1465, %v1467
        %v1469 = vadd.f32 %v1468, 0.0036580483
        %v1470 = vmul.f32 %v1465, %v1469
        %v1471 = vadd.f32 %v1470, 0.05243302
        %v1472 = vmul.f32 %v1465, %v1471
        %v1473 = vadd.f32 %v1472, 0.18741608
        %v1474 = vmul.f32 %v1465, %v1473
        %v1475 = vadd.f32 %v1474, 1.1283791
        %v1476 = vmul.f32 %v1220, %v1475
        %v1477 = vmul.f32 %v1465, 3.8918573e-05
        %v1478 = vadd.f32 %v1477, 0.001143296
        %v1479 = vmul.f32 %v1465, %v1478
        %v1480 = vadd.f32 %v1479, 0.014752088
        %v1481 = vmul.f32 %v1465, %v1480
        %v1482 = vadd.f32 %v1481, 0.112945676
        %v1483 = vmul.f32 %v1465, %v1482
        %v1484 = vadd.f32 %v1483, 0.4994258
        %v1485 = vmul.f32 %v1465, %v1484
        %v1486 = vadd.f32 %v1485, 1.0
        %v1487 = vrcp.pop %v1486
        %v1488 = vmul.f32 %v1486, %v1487
        %v1489 = vsub.f32 1.0, %v1488
        %v1490 = vmul.f32 %v1487, %v1489
        %v1491 = vadd.f32 %v1487, %v1490
        %vm1492 = vweird.f32 %v1486
        %vm1493 = vweird.f32 %v1487
        %vm1494 = vmor %vm1492, %vm1493
        %v1495 = vsel %vm1494, %v1487, %v1491
        %v1496 = vand.u32 2147483647, %v1486
        %vm1497 = vcmp.eq.f32.partialorder %v1496, 8.507059e+37
        %v1498 = vand.u32 %v1486, 2147483648
        %v1499 = vor.u32 1.1754944e-38, %v1498
        %v1500 = vsel %vm1497, %v1499, %v1495
        %v1501 = vmul.f32 %v1476, %v1500
        %v1502 = vmin.f32 %v1501, 1.0
        %v1503 = vmax.f32 %v1502, -1.0
        %v1504 = vmul.f32 %v1221, %v1221
        %v1505 = vmin.f32 16.0, %v1504
        %v1506 = vmul.f32 %v1505, 2.1237322e-06
        %v1507 = vadd.f32 %v1506, 0.00028619796
        %v1508 = vmul.f32 %v1505, %v1507
        %v1509 = vadd.f32 %v1508, 0.0036580483
        %v1510 = vmul.f32 %v1505, %v1509
        %v1511 = vadd.f32 %v1510, 0.05243302
        %v1512 = vmul.f32 %v1505, %v1511
        %v1513 = vadd.f32 %v1512, 0.18741608
        %v1514 = vmul.f32 %v1505, %v1513
        %v1515 = vadd.f32 %v1514, 1.1283791
        %v1516 = vmul.f32 %v1221, %v1515
        %v1517 = vmul.f32 %v1505, 3.8918573e-05
        %v1518 = vadd.f32 %v1517, 0.001143296
        %v1519 = vmul.f32 %v1505, %v1518
        %v1520 = vadd.f32 %v1519, 0.014752088
        %v1521 = vmul.f32 %v1505, %v1520
        %v1522 = vadd.f32 %v1521, 0.112945676
        %v1523 = vmul.f32 %v1505, %v1522
        %v1524 = vadd.f32 %v1523, 0.4994258
        %v1525 = vmul.f32 %v1505, %v1524
        %v1526 = vadd.f32 %v1525, 1.0
        %v1527 = vrcp.pop %v1526
        %v1528 = vmul.f32 %v1526, %v1527
        %v1529 = vsub.f32 1.0, %v1528
        %v1530 = vmul.f32 %v1527, %v1529
        %v1531 = vadd.f32 %v1527, %v1530
        %vm1532 = vweird.f32 %v1526
        %vm1533 = vweird.f32 %v1527
        %vm1534 = vmor %vm1532, %vm1533
        %v1535 = vsel %vm1534, %v1527, %v1531
        %v1536 = vand.u32 2147483647, %v1526
        %vm1537 = vcmp.eq.f32.partialorder %v1536, 8.507059e+37
        %v1538 = vand.u32 %v1526, 2147483648
        %v1539 = vor.u32 1.1754944e-38, %v1538
        %v1540 = vsel %vm1537, %v1539, %v1535
        %v1541 = vmul.f32 %v1516, %v1540
        %v1542 = vmin.f32 %v1541, 1.0
        %v1543 = vmax.f32 %v1542, -1.0
        %v1544 = vmul.f32 %v1222, %v1222
        %v1545 = vmin.f32 16.0, %v1544
        %v1546 = vmul.f32 %v1545, 2.1237322e-06
        %v1547 = vadd.f32 %v1546, 0.00028619796
        %v1548 = vmul.f32 %v1545, %v1547
        %v1549 = vadd.f32 %v1548, 0.0036580483
        %v1550 = vmul.f32 %v1545, %v1549
        %v1551 = vadd.f32 %v1550, 0.05243302
        %v1552 = vmul.f32 %v1545, %v1551
        %v1553 = vadd.f32 %v1552, 0.18741608
        %v1554 = vmul.f32 %v1545, %v1553
        %v1555 = vadd.f32 %v1554, 1.1283791
        %v1556 = vmul.f32 %v1222, %v1555
        %v1557 = vmul.f32 %v1545, 3.8918573e-05
        %v1558 = vadd.f32 %v1557, 0.001143296
        %v1559 = vmul.f32 %v1545, %v1558
        %v1560 = vadd.f32 %v1559, 0.014752088
        %v1561 = vmul.f32 %v1545, %v1560
        %v1562 = vadd.f32 %v1561, 0.112945676
        %v1563 = vmul.f32 %v1545, %v1562
        %v1564 = vadd.f32 %v1563, 0.4994258
        %v1565 = vmul.f32 %v1545, %v1564
        %v1566 = vadd.f32 %v1565, 1.0
        %v1567 = vrcp.pop %v1566
        %v1568 = vmul.f32 %v1566, %v1567
        %v1569 = vsub.f32 1.0, %v1568
        %v1570 = vmul.f32 %v1567, %v1569
        %v1571 = vadd.f32 %v1567, %v1570
        %vm1572 = vweird.f32 %v1566
        %vm1573 = vweird.f32 %v1567
        %vm1574 = vmor %vm1572, %vm1573
        %v1575 = vsel %vm1574, %v1567, %v1571
        %v1576 = vand.u32 2147483647, %v1566
        %vm1577 = vcmp.eq.f32.partialorder %v1576, 8.507059e+37
        %v1578 = vand.u32 %v1566, 2147483648
        %v1579 = vor.u32 1.1754944e-38, %v1578
        %v1580 = vsel %vm1577, %v1579, %v1575
        %v1581 = vmul.f32 %v1556, %v1580
        %v1582 = vmin.f32 %v1581, 1.0
        %v1583 = vmax.f32 %v1582, -1.0
        %v1584 = vmul.f32 %v1223, %v1223
        %v1585 = vmin.f32 16.0, %v1584
        %v1586 = vmul.f32 %v1585, 2.1237322e-06
        %v1587 = vadd.f32 %v1586, 0.00028619796
        %v1588 = vmul.f32 %v1585, %v1587
        %v1589 = vadd.f32 %v1588, 0.0036580483
        %v1590 = vmul.f32 %v1585, %v1589
        %v1591 = vadd.f32 %v1590, 0.05243302
        %v1592 = vmul.f32 %v1585, %v1591
        %v1593 = vadd.f32 %v1592, 0.18741608
        %v1594 = vmul.f32 %v1585, %v1593
        %v1595 = vadd.f32 %v1594, 1.1283791
        %v1596 = vmul.f32 %v1223, %v1595
        %v1597 = vmul.f32 %v1585, 3.8918573e-05
        %v1598 = vadd.f32 %v1597, 0.001143296
        %v1599 = vmul.f32 %v1585, %v1598
        %v1600 = vadd.f32 %v1599, 0.014752088
        %v1601 = vmul.f32 %v1585, %v1600
        %v1602 = vadd.f32 %v1601, 0.112945676
        %v1603 = vmul.f32 %v1585, %v1602
        %v1604 = vadd.f32 %v1603, 0.4994258
        %v1605 = vmul.f32 %v1585, %v1604
        %v1606 = vadd.f32 %v1605, 1.0
        %v1607 = vrcp.pop %v1606
        %v1608 = vmul.f32 %v1606, %v1607
        %v1609 = vsub.f32 1.0, %v1608
        %v1610 = vmul.f32 %v1607, %v1609
        %v1611 = vadd.f32 %v1607, %v1610
        %vm1612 = vweird.f32 %v1606
        %vm1613 = vweird.f32 %v1607
        %vm1614 = vmor %vm1612, %vm1613
        %v1615 = vsel %vm1614, %v1607, %v1611
        %v1616 = vand.u32 2147483647, %v1606
        %vm1617 = vcmp.eq.f32.partialorder %v1616, 8.507059e+37
        %v1618 = vand.u32 %v1606, 2147483648
        %v1619 = vor.u32 1.1754944e-38, %v1618
        %v1620 = vsel %vm1617, %v1619, %v1615
        %v1621 = vmul.f32 %v1596, %v1620
        %v1622 = vmin.f32 %v1621, 1.0
        %v1623 = vmax.f32 %v1622, -1.0
        %v1624 = vadd.f32 %v1263, 1.0
        %v1625 = vadd.f32 %v1303, 1.0
        %v1626 = vadd.f32 %v1343, 1.0
        %v1627 = vadd.f32 %v1383, 1.0
        %v1628 = vadd.f32 %v1423, 1.0
        %v1629 = vadd.f32 %v1463, 1.0
        %v1630 = vadd.f32 %v1503, 1.0
        %v1631 = vadd.f32 %v1543, 1.0
        %v1632 = vadd.f32 %v1583, 1.0
        %v1633 = vadd.f32 %v1623, 1.0
        %v1634 = vmul.f32 %v1204, %v1624
        %v1635 = vmul.f32 %v1205, %v1625
        %v1636 = vmul.f32 %v1206, %v1626
        %v1637 = vmul.f32 %v1207, %v1627
        %v1638 = vmul.f32 %v1208, %v1628
        %v1639 = vmul.f32 %v1209, %v1629
        %v1640 = vmul.f32 %v1210, %v1630
        %v1641 = vmul.f32 %v1211, %v1631
        %v1642 = vmul.f32 %v1212, %v1632
        %v1643 = vmul.f32 %v1213, %v1633
        %1644 = vmatpush.msra.mxu0 %v348
        %1645 = vmatpush.msra.mxu0 %v347
        %1646 = vmatpush.msra.mxu0 %v346
        %1647 = vmatpush.msra.mxu0 %v345
        %1648 = vmatpush.msra.mxu0 %v344
        %1649 = vmatpush.msra.mxu0 %v343
        %1650 = vmatpush.msra.mxu0 %v342
        %1651 = vmatpush.msra.mxu0 %v341
        %1652 = vmatpush.msra.mxu0 %v340
        %1653 = vmatpush.msra.mxu0 %v339
        %1654 = vmatpush.msra.mxu0 %v338
        %1655 = vmatpush.msra.mxu0 %v337
        %1656 = vmatpush.msra.mxu0 %v336
        %1657 = vmatpush.msra.mxu0 %v335
        %1658 = vmatpush.msra.mxu0 %v334
        %1659 = vmatpush.msra.mxu0 %v333
        %1660 = vmatmul.f32.gmra.mxu0 %v1634
        %v1661 = vpop.f32.mrf.mxu0
        %v1662 = vadd.f32 0.0, %v1661
        %1663 = vmatmul.f32.gmra.mxu0 %v1635
        %v1664 = vpop.f32.mrf.mxu0
        %v1665 = vadd.f32 0.0, %v1664
        %1666 = vmatmul.f32.gmra.mxu0 %v1636
        %v1667 = vpop.f32.mrf.mxu0
        %v1668 = vadd.f32 0.0, %v1667
        %1669 = vmatmul.f32.gmra.mxu0 %v1637
        %v1670 = vpop.f32.mrf.mxu0
        %v1671 = vadd.f32 0.0, %v1670
        %1672 = vmatmul.f32.gmra.mxu0 %v1638
        %v1673 = vpop.f32.mrf.mxu0
        %v1674 = vadd.f32 0.0, %v1673
        %1675 = vmatmul.f32.gmra.mxu0 %v1639
        %v1676 = vpop.f32.mrf.mxu0
        %v1677 = vadd.f32 0.0, %v1676
        %1678 = vmatmul.f32.gmra.mxu0 %v1640
        %v1679 = vpop.f32.mrf.mxu0
        %v1680 = vadd.f32 0.0, %v1679
        %1681 = vmatmul.f32.gmra.mxu0 %v1641
        %v1682 = vpop.f32.mrf.mxu0
        %v1683 = vadd.f32 0.0, %v1682
        %1684 = vmatmul.f32.gmra.mxu0 %v1642
        %v1685 = vpop.f32.mrf.mxu0
        %v1686 = vadd.f32 0.0, %v1685
        %1687 = vmatmul.f32.gmra.mxu0 %v1643
        %v1688 = vpop.f32.mrf.mxu0
        %v1689 = vadd.f32 0.0, %v1688
        %1690 = vdwg.mxu0
        %v1691 = vmul.f32 %v1662, 0.03125
        %v1692 = vmul.f32 %v1665, 0.03125
        %v1693 = vmul.f32 %v1668, 0.03125
        %v1694 = vmul.f32 %v1671, 0.03125
        %v1695 = vmul.f32 %v1674, 0.03125
        %v1696 = vmul.f32 %v1677, 0.03125
        %v1697 = vmul.f32 %v1680, 0.03125
        %v1698 = vmul.f32 %v1683, 0.03125
        %v1699 = vmul.f32 %v1686, 0.03125
        %v1700 = vmul.f32 %v1689, 0.03125
        %v1701 = vsub.f32 %v1634, %v1691
        %v1702 = vsub.f32 %v1635, %v1692
        %v1703 = vsub.f32 %v1636, %v1693
        %v1704 = vsub.f32 %v1637, %v1694
        %v1705 = vsub.f32 %v1638, %v1695
        %v1706 = vsub.f32 %v1639, %v1696
        %v1707 = vsub.f32 %v1640, %v1697
        %v1708 = vsub.f32 %v1641, %v1698
        %v1709 = vsub.f32 %v1642, %v1699
        %v1710 = vsub.f32 %v1643, %v1700
        %v1711 = vmul.f32 %v1701, %v1701
        %v1712 = vmul.f32 %v1702, %v1702
        %v1713 = vmul.f32 %v1703, %v1703
        %v1714 = vmul.f32 %v1704, %v1704
        %v1715 = vmul.f32 %v1705, %v1705
        %v1716 = vmul.f32 %v1706, %v1706
        %v1717 = vmul.f32 %v1707, %v1707
        %v1718 = vmul.f32 %v1708, %v1708
        %v1719 = vmul.f32 %v1709, %v1709
        %v1720 = vmul.f32 %v1710, %v1710
        %1721 = vmatpush.msra.mxu0 %v348
        %1722 = vmatpush.msra.mxu0 %v347
        %1723 = vmatpush.msra.mxu0 %v346
        %1724 = vmatpush.msra.mxu0 %v345
        %1725 = vmatpush.msra.mxu0 %v344
        %1726 = vmatpush.msra.mxu0 %v343
        %1727 = vmatpush.msra.mxu0 %v342
        %1728 = vmatpush.msra.mxu0 %v341
        %1729 = vmatpush.msra.mxu0 %v340
        %1730 = vmatpush.msra.mxu0 %v339
        %1731 = vmatpush.msra.mxu0 %v338
        %1732 = vmatpush.msra.mxu0 %v337
        %1733 = vmatpush.msra.mxu0 %v336
        %1734 = vmatpush.msra.mxu0 %v335
        %1735 = vmatpush.msra.mxu0 %v334
        %1736 = vmatpush.msra.mxu0 %v333
        %1737 = vmatmul.f32.gmra.mxu0 %v1711
        %v1738 = vpop.f32.mrf.mxu0
        %v1739 = vadd.f32 0.0, %v1738
        %1740 = vmatmul.f32.gmra.mxu0 %v1712
        %v1741 = vpop.f32.mrf.mxu0
        %v1742 = vadd.f32 0.0, %v1741
        %1743 = vmatmul.f32.gmra.mxu0 %v1713
        %v1744 = vpop.f32.mrf.mxu0
        %v1745 = vadd.f32 0.0, %v1744
        %1746 = vmatmul.f32.gmra.mxu0 %v1714
        %v1747 = vpop.f32.mrf.mxu0
        %v1748 = vadd.f32 0.0, %v1747
        %1749 = vmatmul.f32.gmra.mxu0 %v1715
        %v1750 = vpop.f32.mrf.mxu0
        %v1751 = vadd.f32 0.0, %v1750
        %1752 = vmatmul.f32.gmra.mxu0 %v1716
        %v1753 = vpop.f32.mrf.mxu0
        %v1754 = vadd.f32 0.0, %v1753
        %1755 = vmatmul.f32.gmra.mxu0 %v1717
        %v1756 = vpop.f32.mrf.mxu0
        %v1757 = vadd.f32 0.0, %v1756
        %1758 = vmatmul.f32.gmra.mxu0 %v1718
        %v1759 = vpop.f32.mrf.mxu0
        %v1760 = vadd.f32 0.0, %v1759
        %1761 = vmatmul.f32.gmra.mxu0 %v1719
        %v1762 = vpop.f32.mrf.mxu0
        %v1763 = vadd.f32 0.0, %v1762
        %1764 = vmatmul.f32.gmra.mxu0 %v1720
        %v1765 = vpop.f32.mrf.mxu0
        %v1766 = vadd.f32 0.0, %v1765
        %1767 = vdwg.mxu0
        %v1768 = vmul.f32 %v1739, 0.03125
        %v1769 = vmul.f32 %v1742, 0.03125
        %v1770 = vmul.f32 %v1745, 0.03125
        %v1771 = vmul.f32 %v1748, 0.03125
        %v1772 = vmul.f32 %v1751, 0.03125
        %v1773 = vmul.f32 %v1754, 0.03125
        %v1774 = vmul.f32 %v1757, 0.03125
        %v1775 = vmul.f32 %v1760, 0.03125
        %v1776 = vmul.f32 %v1763, 0.03125
        %v1777 = vmul.f32 %v1766, 0.03125
        %v1778 = vadd.f32 %v1768, 1e-05
        %v1779 = vadd.f32 %v1769, 1e-05
        %v1780 = vadd.f32 %v1770, 1e-05
        %v1781 = vadd.f32 %v1771, 1e-05
        %v1782 = vadd.f32 %v1772, 1e-05
        %v1783 = vadd.f32 %v1773, 1e-05
        %v1784 = vadd.f32 %v1774, 1e-05
        %v1785 = vadd.f32 %v1775, 1e-05
        %v1786 = vadd.f32 %v1776, 1e-05
        %v1787 = vadd.f32 %v1777, 1e-05
        %v1788 = vrsqrt.pop %v1778
        %v1789 = vmul.f32 %v1788, %v1778
        %v1790 = vmul.f32 %v1789, %v1788
        %v1791 = vmul.f32 0.5, %v1790
        %v1792 = vsub.f32 1.5, %v1791
        %v1793 = vmul.f32 %v1788, %v1792
        %vm1794 = vweird.f32 %v1778
        %vm1795 = vweird.f32 %v1788
        %vm1796 = vmor %vm1794, %vm1795
        %v1797 = vsel %vm1796, %v1788, %v1793
        %v1798 = vrsqrt.pop %v1779
        %v1799 = vmul.f32 %v1798, %v1779
        %v1800 = vmul.f32 %v1799, %v1798
        %v1801 = vmul.f32 0.5, %v1800
        %v1802 = vsub.f32 1.5, %v1801
        %v1803 = vmul.f32 %v1798, %v1802
        %vm1804 = vweird.f32 %v1779
        %vm1805 = vweird.f32 %v1798
        %vm1806 = vmor %vm1804, %vm1805
        %v1807 = vsel %vm1806, %v1798, %v1803
        %v1808 = vrsqrt.pop %v1780
        %v1809 = vmul.f32 %v1808, %v1780
        %v1810 = vmul.f32 %v1809, %v1808
        %v1811 = vmul.f32 0.5, %v1810
        %v1812 = vsub.f32 1.5, %v1811
        %v1813 = vmul.f32 %v1808, %v1812
        %vm1814 = vweird.f32 %v1780
        %vm1815 = vweird.f32 %v1808
        %vm1816 = vmor %vm1814, %vm1815
        %v1817 = vsel %vm1816, %v1808, %v1813
        %v1818 = vrsqrt.pop %v1781
        %v1819 = vmul.f32 %v1818, %v1781
        %v1820 = vmul.f32 %v1819, %v1818
        %v1821 = vmul.f32 0.5, %v1820
        %v1822 = vsub.f32 1.5, %v1821
        %v1823 = vmul.f32 %v1818, %v1822
        %vm1824 = vweird.f32 %v1781
        %vm1825 = vweird.f32 %v1818
        %vm1826 = vmor %vm1824, %vm1825
        %v1827 = vsel %vm1826, %v1818, %v1823
        %v1828 = vrsqrt.pop %v1782
        %v1829 = vmul.f32 %v1828, %v1782
        %v1830 = vmul.f32 %v1829, %v1828
        %v1831 = vmul.f32 0.5, %v1830
        %v1832 = vsub.f32 1.5, %v1831
        %v1833 = vmul.f32 %v1828, %v1832
        %vm1834 = vweird.f32 %v1782
        %vm1835 = vweird.f32 %v1828
        %vm1836 = vmor %vm1834, %vm1835
        %v1837 = vsel %vm1836, %v1828, %v1833
        %v1838 = vrsqrt.pop %v1783
        %v1839 = vmul.f32 %v1838, %v1783
        %v1840 = vmul.f32 %v1839, %v1838
        %v1841 = vmul.f32 0.5, %v1840
        %v1842 = vsub.f32 1.5, %v1841
        %v1843 = vmul.f32 %v1838, %v1842
        %vm1844 = vweird.f32 %v1783
        %vm1845 = vweird.f32 %v1838
        %vm1846 = vmor %vm1844, %vm1845
        %v1847 = vsel %vm1846, %v1838, %v1843
        %v1848 = vrsqrt.pop %v1784
        %v1849 = vmul.f32 %v1848, %v1784
        %v1850 = vmul.f32 %v1849, %v1848
        %v1851 = vmul.f32 0.5, %v1850
        %v1852 = vsub.f32 1.5, %v1851
        %v1853 = vmul.f32 %v1848, %v1852
        %vm1854 = vweird.f32 %v1784
        %vm1855 = vweird.f32 %v1848
        %vm1856 = vmor %vm1854, %vm1855
        %v1857 = vsel %vm1856, %v1848, %v1853
        %v1858 = vrsqrt.pop %v1785
        %v1859 = vmul.f32 %v1858, %v1785
        %v1860 = vmul.f32 %v1859, %v1858
        %v1861 = vmul.f32 0.5, %v1860
        %v1862 = vsub.f32 1.5, %v1861
        %v1863 = vmul.f32 %v1858, %v1862
        %vm1864 = vweird.f32 %v1785
        %vm1865 = vweird.f32 %v1858
        %vm1866 = vmor %vm1864, %vm1865
        %v1867 = vsel %vm1866, %v1858, %v1863
        %v1868 = vrsqrt.pop %v1786
        %v1869 = vmul.f32 %v1868, %v1786
        %v1870 = vmul.f32 %v1869, %v1868
        %v1871 = vmul.f32 0.5, %v1870
        %v1872 = vsub.f32 1.5, %v1871
        %v1873 = vmul.f32 %v1868, %v1872
        %vm1874 = vweird.f32 %v1786
        %vm1875 = vweird.f32 %v1868
        %vm1876 = vmor %vm1874, %vm1875
        %v1877 = vsel %vm1876, %v1868, %v1873
        %v1878 = vrsqrt.pop %v1787
        %v1879 = vmul.f32 %v1878, %v1787
        %v1880 = vmul.f32 %v1879, %v1878
        %v1881 = vmul.f32 0.5, %v1880
        %v1882 = vsub.f32 1.5, %v1881
        %v1883 = vmul.f32 %v1878, %v1882
        %vm1884 = vweird.f32 %v1787
        %vm1885 = vweird.f32 %v1878
        %vm1886 = vmor %vm1884, %vm1885
        %v1887 = vsel %vm1886, %v1878, %v1883
        %v1888 = vmul.f32 %v1701, %v1797
        %v1889 = vmul.f32 %v1702, %v1807
        %v1890 = vmul.f32 %v1703, %v1817
        %v1891 = vmul.f32 %v1704, %v1827
        %v1892 = vmul.f32 %v1705, %v1837
        %v1893 = vmul.f32 %v1706, %v1847
        %v1894 = vmul.f32 %v1707, %v1857
        %v1895 = vmul.f32 %v1708, %v1867
        %v1896 = vmul.f32 %v1709, %v1877
        %v1897 = vmul.f32 %v1710, %v1887
        %v1898 = vperm.slane %v349, 4
        %v1899 = vmul.f32 %v1888, %v1898
        %v1900 = vmul.f32 %v1889, %v1898
        %v1901 = vmul.f32 %v1890, %v1898
        %v1902 = vmul.f32 %v1891, %v1898
        %v1903 = vmul.f32 %v1892, %v1898
        %v1904 = vmul.f32 %v1893, %v1898
        %v1905 = vmul.f32 %v1894, %v1898
        %v1906 = vmul.f32 %v1895, %v1898
        %v1907 = vmul.f32 %v1896, %v1898
        %v1908 = vmul.f32 %v1897, %v1898
        %v1909 = vperm.slane %v349, 5
        %v1910 = vadd.f32 %v1899, %v1909
        %v1911 = vadd.f32 %v1900, %v1909
        %v1912 = vadd.f32 %v1901, %v1909
        %v1913 = vadd.f32 %v1902, %v1909
        %v1914 = vadd.f32 %v1903, %v1909
        %v1915 = vadd.f32 %v1904, %v1909
        %v1916 = vadd.f32 %v1905, %v1909
        %v1917 = vadd.f32 %v1906, %v1909
        %v1918 = vadd.f32 %v1907, %v1909
        %v1919 = vadd.f32 %v1908, %v1909
        %v1920 = vmul.f32 %v1910, %v1910
        %v1921 = vmul.f32 %v1911, %v1911
        %v1922 = vmul.f32 %v1912, %v1912
        %v1923 = vmul.f32 %v1913, %v1913
        %v1924 = vmul.f32 %v1914, %v1914
        %v1925 = vmul.f32 %v1915, %v1915
        %v1926 = vmul.f32 %v1916, %v1916
        %v1927 = vmul.f32 %v1917, %v1917
        %v1928 = vmul.f32 %v1918, %v1918
        %v1929 = vmul.f32 %v1919, %v1919
        %1930 = vmatpush.msra.mxu0 %v348
        %1931 = vmatpush.msra.mxu0 %v347
        %1932 = vmatpush.msra.mxu0 %v346
        %1933 = vmatpush.msra.mxu0 %v345
        %1934 = vmatpush.msra.mxu0 %v344
        %1935 = vmatpush.msra.mxu0 %v343
        %1936 = vmatpush.msra.mxu0 %v342
        %1937 = vmatpush.msra.mxu0 %v341
        %1938 = vmatpush.msra.mxu0 %v340
        %1939 = vmatpush.msra.mxu0 %v339
        %1940 = vmatpush.msra.mxu0 %v338
        %1941 = vmatpush.msra.mxu0 %v337
        %1942 = vmatpush.msra.mxu0 %v336
        %1943 = vmatpush.msra.mxu0 %v335
        %1944 = vmatpush.msra.mxu0 %v334
        %1945 = vmatpush.msra.mxu0 %v333
        %1946 = vmatmul.f32.gmra.mxu0 %v1920
        %v1947 = vpop.f32.mrf.mxu0
        %v1948 = vadd.f32 0.0, %v1947
        %1949 = vmatmul.f32.gmra.mxu0 %v1921
        %v1950 = vpop.f32.mrf.mxu0
        %v1951 = vadd.f32 0.0, %v1950
        %1952 = vmatmul.f32.gmra.mxu0 %v1922
        %v1953 = vpop.f32.mrf.mxu0
        %v1954 = vadd.f32 0.0, %v1953
        %1955 = vmatmul.f32.gmra.mxu0 %v1923
        %v1956 = vpop.f32.mrf.mxu0
        %v1957 = vadd.f32 0.0, %v1956
        %1958 = vmatmul.f32.gmra.mxu0 %v1924
        %v1959 = vpop.f32.mrf.mxu0
        %v1960 = vadd.f32 0.0, %v1959
        %1961 = vmatmul.f32.gmra.mxu0 %v1925
        %v1962 = vpop.f32.mrf.mxu0
        %v1963 = vadd.f32 0.0, %v1962
        %1964 = vmatmul.f32.gmra.mxu0 %v1926
        %v1965 = vpop.f32.mrf.mxu0
        %v1966 = vadd.f32 0.0, %v1965
        %1967 = vmatmul.f32.gmra.mxu0 %v1927
        %v1968 = vpop.f32.mrf.mxu0
        %v1969 = vadd.f32 0.0, %v1968
        %1970 = vmatmul.f32.gmra.mxu0 %v1928
        %v1971 = vpop.f32.mrf.mxu0
        %v1972 = vadd.f32 0.0, %v1971
        %1973 = vmatmul.f32.gmra.mxu0 %v1929
        %v1974 = vpop.f32.mrf.mxu0
        %v1975 = vadd.f32 0.0, %v1974
        %1976 = vdwg.mxu0
        %v1977 = vmax.f32 %v1948, 1e-24
        %v1978 = vmax.f32 %v1951, 1e-24
        %v1979 = vmax.f32 %v1954, 1e-24
        %v1980 = vmax.f32 %v1957, 1e-24
        %v1981 = vmax.f32 %v1960, 1e-24
        %v1982 = vmax.f32 %v1963, 1e-24
        %v1983 = vmax.f32 %v1966, 1e-24
        %v1984 = vmax.f32 %v1969, 1e-24
        %v1985 = vmax.f32 %v1972, 1e-24
        %v1986 = vmax.f32 %v1975, 1e-24
        %v1987 = vrsqrt.pop %v1977
        %v1988 = vmul.f32 %v1987, %v1977
        %v1989 = vmul.f32 %v1988, %v1987
        %v1990 = vmul.f32 0.5, %v1989
        %v1991 = vsub.f32 1.5, %v1990
        %v1992 = vmul.f32 %v1987, %v1991
        %vm1993 = vweird.f32 %v1977
        %vm1994 = vweird.f32 %v1987
        %vm1995 = vmor %vm1993, %vm1994
        %v1996 = vsel %vm1995, %v1987, %v1992
        %v1997 = vrsqrt.pop %v1978
        %v1998 = vmul.f32 %v1997, %v1978
        %v1999 = vmul.f32 %v1998, %v1997
        %v2000 = vmul.f32 0.5, %v1999
        %v2001 = vsub.f32 1.5, %v2000
        %v2002 = vmul.f32 %v1997, %v2001
        %vm2003 = vweird.f32 %v1978
        %vm2004 = vweird.f32 %v1997
        %vm2005 = vmor %vm2003, %vm2004
        %v2006 = vsel %vm2005, %v1997, %v2002
        %v2007 = vrsqrt.pop %v1979
        %v2008 = vmul.f32 %v2007, %v1979
        %v2009 = vmul.f32 %v2008, %v2007
        %v2010 = vmul.f32 0.5, %v2009
        %v2011 = vsub.f32 1.5, %v2010
        %v2012 = vmul.f32 %v2007, %v2011
        %vm2013 = vweird.f32 %v1979
        %vm2014 = vweird.f32 %v2007
        %vm2015 = vmor %vm2013, %vm2014
        %v2016 = vsel %vm2015, %v2007, %v2012
        %v2017 = vrsqrt.pop %v1980
        %v2018 = vmul.f32 %v2017, %v1980
        %v2019 = vmul.f32 %v2018, %v2017
        %v2020 = vmul.f32 0.5, %v2019
        %v2021 = vsub.f32 1.5, %v2020
        %v2022 = vmul.f32 %v2017, %v2021
        %vm2023 = vweird.f32 %v1980
        %vm2024 = vweird.f32 %v2017
        %vm2025 = vmor %vm2023, %vm2024
        %v2026 = vsel %vm2025, %v2017, %v2022
        %v2027 = vrsqrt.pop %v1981
        %v2028 = vmul.f32 %v2027, %v1981
        %v2029 = vmul.f32 %v2028, %v2027
        %v2030 = vmul.f32 0.5, %v2029
        %v2031 = vsub.f32 1.5, %v2030
        %v2032 = vmul.f32 %v2027, %v2031
        %vm2033 = vweird.f32 %v1981
        %vm2034 = vweird.f32 %v2027
        %vm2035 = vmor %vm2033, %vm2034
        %v2036 = vsel %vm2035, %v2027, %v2032
        %v2037 = vrsqrt.pop %v1982
        %v2038 = vmul.f32 %v2037, %v1982
        %v2039 = vmul.f32 %v2038, %v2037
        %v2040 = vmul.f32 0.5, %v2039
        %v2041 = vsub.f32 1.5, %v2040
        %v2042 = vmul.f32 %v2037, %v2041
        %vm2043 = vweird.f32 %v1982
        %vm2044 = vweird.f32 %v2037
        %vm2045 = vmor %vm2043, %vm2044
        %v2046 = vsel %vm2045, %v2037, %v2042
        %v2047 = vrsqrt.pop %v1983
        %v2048 = vmul.f32 %v2047, %v1983
        %v2049 = vmul.f32 %v2048, %v2047
        %v2050 = vmul.f32 0.5, %v2049
        %v2051 = vsub.f32 1.5, %v2050
        %v2052 = vmul.f32 %v2047, %v2051
        %vm2053 = vweird.f32 %v1983
        %vm2054 = vweird.f32 %v2047
        %vm2055 = vmor %vm2053, %vm2054
        %v2056 = vsel %vm2055, %v2047, %v2052
        %v2057 = vrsqrt.pop %v1984
        %v2058 = vmul.f32 %v2057, %v1984
        %v2059 = vmul.f32 %v2058, %v2057
        %v2060 = vmul.f32 0.5, %v2059
        %v2061 = vsub.f32 1.5, %v2060
        %v2062 = vmul.f32 %v2057, %v2061
        %vm2063 = vweird.f32 %v1984
        %vm2064 = vweird.f32 %v2057
        %vm2065 = vmor %vm2063, %vm2064
        %v2066 = vsel %vm2065, %v2057, %v2062
        %v2067 = vrsqrt.pop %v1985
        %v2068 = vmul.f32 %v2067, %v1985
        %v2069 = vmul.f32 %v2068, %v2067
        %v2070 = vmul.f32 0.5, %v2069
        %v2071 = vsub.f32 1.5, %v2070
        %v2072 = vmul.f32 %v2067, %v2071
        %vm2073 = vweird.f32 %v1985
        %vm2074 = vweird.f32 %v2067
        %vm2075 = vmor %vm2073, %vm2074
        %v2076 = vsel %vm2075, %v2067, %v2072
        %v2077 = vrsqrt.pop %v1986
        %v2078 = vmul.f32 %v2077, %v1986
        %v2079 = vmul.f32 %v2078, %v2077
        %v2080 = vmul.f32 0.5, %v2079
        %v2081 = vsub.f32 1.5, %v2080
        %v2082 = vmul.f32 %v2077, %v2081
        %vm2083 = vweird.f32 %v1986
        %vm2084 = vweird.f32 %v2077
        %vm2085 = vmor %vm2083, %vm2084
        %v2086 = vsel %vm2085, %v2077, %v2082
        %v2087 = vmul.f32 %v1910, %v1996
        %v2088 = vmul.f32 %v1911, %v2006
        %v2089 = vmul.f32 %v1912, %v2016
        %v2090 = vmul.f32 %v1913, %v2026
        %v2091 = vmul.f32 %v1914, %v2036
        %v2092 = vmul.f32 %v1915, %v2046
        %v2093 = vmul.f32 %v1916, %v2056
        %v2094 = vmul.f32 %v1917, %v2066
        %v2095 = vmul.f32 %v1918, %v2076
        %v2096 = vmul.f32 %v1919, %v2086
        %v2097 = vld [vmem:[%s3] sm:$0xff]
        %v2098 = vld [vmem:[%s3 + $0x8] sm:$0xff]
        %v2099 = vld [vmem:[%s3 + $0x10] sm:$0xff]
        %v2100 = vld [vmem:[%s3 + $0x18] sm:$0xff]
        %v2101 = vld [vmem:[%s3 + $0x20] sm:$0xff]
        %v2102 = vld [vmem:[%s3 + $0x28] sm:$0xff]
        %v2103 = vld [vmem:[%s3 + $0x30] sm:$0xff]
        %v2104 = vld [vmem:[%s3 + $0x38] sm:$0xff]
        %v2105 = vld [vmem:[%s3 + $0x40] sm:$0xff]
        %v2106 = vld [vmem:[%s3 + $0x48] sm:$0xff]
        %v2107 = vld [vmem:[%s3 + $0x50] sm:$0xff]
        %v2108 = vld [vmem:[%s3 + $0x58] sm:$0xff]
        %v2109 = vld [vmem:[%s3 + $0x60] sm:$0xff]
        %v2110 = vld [vmem:[%s3 + $0x68] sm:$0xff]
        %v2111 = vld [vmem:[%s3 + $0x70] sm:$0xff]
        %v2112 = vld [vmem:[%s3 + $0x78] sm:$0xff]
        %v2113 = vperm.slane %v349, 6
        %2114 = vmatpush.msra.mxu0 %v2112
        %2115 = vmatpush.msra.mxu0 %v2111
        %2116 = vmatpush.msra.mxu0 %v2110
        %2117 = vmatpush.msra.mxu0 %v2109
        %2118 = vmatpush.msra.mxu0 %v2108
        %2119 = vmatpush.msra.mxu0 %v2107
        %2120 = vmatpush.msra.mxu0 %v2106
        %2121 = vmatpush.msra.mxu0 %v2105
        %2122 = vmatpush.msra.mxu0 %v2104
        %2123 = vmatpush.msra.mxu0 %v2103
        %2124 = vmatpush.msra.mxu0 %v2102
        %2125 = vmatpush.msra.mxu0 %v2101
        %2126 = vmatpush.msra.mxu0 %v2100
        %2127 = vmatpush.msra.mxu0 %v2099
        %2128 = vmatpush.msra.mxu0 %v2098
        %2129 = vmatpush.msra.mxu0 %v2097
        %2130 = vmatmul.f32.gmra.mxu0 %v2087
        %v2131 = vpop.f32.mrf.mxu0
        %v2132 = vadd.f32 %v2113, %v2131
        %2133 = vmatmul.f32.gmra.mxu0 %v2088
        %v2134 = vpop.f32.mrf.mxu0
        %v2135 = vadd.f32 %v2113, %v2134
        %2136 = vmatmul.f32.gmra.mxu0 %v2089
        %v2137 = vpop.f32.mrf.mxu0
        %v2138 = vadd.f32 %v2113, %v2137
        %2139 = vmatmul.f32.gmra.mxu0 %v2090
        %v2140 = vpop.f32.mrf.mxu0
        %v2141 = vadd.f32 %v2113, %v2140
        %2142 = vmatmul.f32.gmra.mxu0 %v2091
        %v2143 = vpop.f32.mrf.mxu0
        %v2144 = vadd.f32 %v2113, %v2143
        %2145 = vmatmul.f32.gmra.mxu0 %v2092
        %v2146 = vpop.f32.mrf.mxu0
        %v2147 = vadd.f32 %v2113, %v2146
        %2148 = vmatmul.f32.gmra.mxu0 %v2093
        %v2149 = vpop.f32.mrf.mxu0
        %v2150 = vadd.f32 %v2113, %v2149
        %2151 = vmatmul.f32.gmra.mxu0 %v2094
        %v2152 = vpop.f32.mrf.mxu0
        %v2153 = vadd.f32 %v2113, %v2152
        %2154 = vmatmul.f32.gmra.mxu0 %v2095
        %v2155 = vpop.f32.mrf.mxu0
        %v2156 = vadd.f32 %v2113, %v2155
        %2157 = vmatmul.f32.gmra.mxu0 %v2096
        %v2158 = vpop.f32.mrf.mxu0
        %v2159 = vadd.f32 %v2113, %v2158
        %2160 = vdwg.mxu0
        %vm2161 = vcmask 523264
        %2162 = vst.msk [vmem:[%s303] sm:$0xff] %vm2161, %v2132
        %2163 = vst.msk [vmem:[%s303 + $0x8] sm:$0xff] %vm2161, %v2135
        %2164 = vst.msk [vmem:[%s303 + $0x10] sm:$0xff] %vm2161, %v2138
        %2165 = vst.msk [vmem:[%s303 + $0x18] sm:$0xff] %vm2161, %v2141
        %2166 = vst.msk [vmem:[%s303 + $0x20] sm:$0xff] %vm2161, %v2144
        %2167 = vst.msk [vmem:[%s303 + $0x28] sm:$0xff] %vm2161, %v2147
        %2168 = vst.msk [vmem:[%s303 + $0x30] sm:$0xff] %vm2161, %v2150
        %2169 = vst.msk [vmem:[%s303 + $0x38] sm:$0xff] %vm2161, %v2153
        %2170 = vst.msk [vmem:[%s303 + $0x40] sm:$0xff] %vm2161, %v2156
        %2171 = vst.msk [vmem:[%s303 + $0x48] sm:$0xff] %vm2161, %v2159
        %s2172 = sand.u32 %s158, 1
        %s2173 = sand.u32 %s158, 1
        %s2174 = smul.addr %s2173, 80
        %s2175 = scalar_lea.vmem [#allocation7], %s2174
        // Predicated region
        $region57: #{tpu_custom_call.1} parent=43 // pred_check
          %p2176 = pneg %p168
        $region58: #{tpu_custom_call.1} parent=43 // pred_check_branch
          %2178 = sbr.rel (%p2176) target = $region60
        $region59: #{tpu_custom_call.1} parent=43 // pred_region
          %s2179 = smul.u32 10, %s19
          %s2180 = ssub.s32 19, %s2179
          %p2181 = scmp.lt.s32.totalorder %s2180, 10
          %s2182 = scalar_select %p2181, %s2180, 10
          %s2183 = smul.u32 8, %s2182
          %p2184 = scmp.ne.s32.totalorder 0, %s2183
          %s2185 = smul.addr %s2179, 8
          %s2186 = scalar_lea.vmem %s6, %s2185
          // Predicated region
          $region61: #{tpu_custom_call.1} parent=59 // pred_check
            %p2187 = pneg %p2184
          $region62: #{tpu_custom_call.1} parent=59 // pred_check_branch
            %2189 = sbr.rel (%p2187) target = $region64
          $region63: #{tpu_custom_call.1} parent=59 // pred_region
            // Predicated region
            $region65: #{tpu_custom_call.1} parent=63 // pred_check
              _
            $region66: #{tpu_custom_call.1} parent=63 // pred_check_branch
              %2191 = sbr.rel (0) target = $region68
            $region67: #{tpu_custom_call.1} parent=63 // pred_region
              // Predicated region
              $region87: #{tpu_custom_call.1} parent=67 // pred_check
                _
              $region88: #{tpu_custom_call.1} parent=67 // pred_check_branch
                %2260 = sbr.rel (0) target = $region90
              $region89: #{tpu_custom_call.1} parent=67 // pred_region
                %s2261 = sdiv.u32.pop %s2182, 10
                %s2262 = srem.u32.pop %s2182, 10
                // While loop
                $region91: #{tpu_custom_call.1} parent=89 // loop_pre_header
                  _
                $region92: #{tpu_custom_call.1} parent=89 // loop_header
                  %s2264 = sphi 0, %s2266
                  %p2265 = scmp.ge.s32.totalorder %s2264, %s2261
                  %s2269 = sphi 0, %s2294
                  %s2270 = sphi %s2175, %s2297
                  %s2271 = sphi %s2186, %s2298
                $region93: #{tpu_custom_call.1} parent=89 // loop_header_branch
                  %2268 = sbr.rel (%p2265) target = $region97
                $region94: #{tpu_custom_call.1} parent=89 // loop_body
                  %v2272 = vld [vmem:[%s2270] sm:$0xff]
                  %2273 = vst [vmem:[%s2271] sm:$0xff] %v2272
                  %v2274 = vld [vmem:[%s2270 + $0x8] sm:$0xff]
                  %2275 = vst [vmem:[%s2271 + $0x8] sm:$0xff] %v2274
                  %v2276 = vld [vmem:[%s2270 + $0x10] sm:$0xff]
                  %2277 = vst [vmem:[%s2271 + $0x10] sm:$0xff] %v2276
                  %v2278 = vld [vmem:[%s2270 + $0x18] sm:$0xff]
                  %2279 = vst [vmem:[%s2271 + $0x18] sm:$0xff] %v2278
                  %v2280 = vld [vmem:[%s2270 + $0x20] sm:$0xff]
                  %2281 = vst [vmem:[%s2271 + $0x20] sm:$0xff] %v2280
                  %v2282 = vld [vmem:[%s2270 + $0x28] sm:$0xff]
                  %2283 = vst [vmem:[%s2271 + $0x28] sm:$0xff] %v2282
                  %v2284 = vld [vmem:[%s2270 + $0x30] sm:$0xff]
                  %2285 = vst [vmem:[%s2271 + $0x30] sm:$0xff] %v2284
                  %v2286 = vld [vmem:[%s2270 + $0x38] sm:$0xff]
                  %2287 = vst [vmem:[%s2271 + $0x38] sm:$0xff] %v2286
                  %v2288 = vld [vmem:[%s2270 + $0x40] sm:$0xff]
                  %2289 = vst [vmem:[%s2271 + $0x40] sm:$0xff] %v2288
                  %v2290 = vld [vmem:[%s2270 + $0x48] sm:$0xff]
                  %2291 = vst [vmem:[%s2271 + $0x48] sm:$0xff] %v2290
                  %s2292 = sadd.s32 1, %s2269
                  %p2293 = scmp.ge.s32.totalorder %s2292, %s2261
                  %s2294 = scalar_select %p2293, 0, %s2292
                  %s2295 = smul.u32 %s2294, 80
                  %s2296 = smul.u32 %s2294, 80
                  %s2297 = scalar_lea.vmem %s2175, %s2295 [#allocation7]
                  %s2298 = scalar_lea.vmem %s2186, %s2296
                $region95: #{tpu_custom_call.1} parent=89 // loop_footer
                  %s2266 = sadd.s32 %s2264, 1
                $region96: #{tpu_custom_call.1} parent=89 // loop_footer_branch
                  %2263 = sbr.rel target = $region92
                $region97: #{tpu_custom_call.1} parent=89 // loop_exit
                  _
                %s2299 = sdiv.u32.pop %s2182, 10
                %s2300 = srem.u32.pop %s2182, 10
                %s2301 = smul.u32 %s2299, 10
                %s2302 = smul.u32 8, %s2301
                %s2303 = scalar_lea.vmem %s2175, %s2302 [#allocation7]
                %s2304 = smul.u32 8, %s2301
                %s2305 = scalar_lea.vmem %s2186, %s2304
                // While loop
                $region98: #{tpu_custom_call.1} parent=89 // loop_pre_header
                  _
                $region99: #{tpu_custom_call.1} parent=89 // loop_header
                  %s2307 = sphi 0, %s2309
                  %p2308 = scmp.ge.s32.totalorder %s2307, %s2300
                  %s2312 = sphi 0, %s2319
                  %s2313 = sphi %s2303, %s2322
                  %s2314 = sphi %s2305, %s2323
                $region100: #{tpu_custom_call.1} parent=89 // loop_header_branch
                  %2311 = sbr.rel (%p2308) target = $region104
                $region101: #{tpu_custom_call.1} parent=89 // loop_body
                  %v2315 = vld [vmem:[%s2313] sm:$0xff]
                  %2316 = vst [vmem:[%s2314] sm:$0xff] %v2315
                  %s2317 = sadd.s32 1, %s2312
                  %p2318 = scmp.ge.s32.totalorder %s2317, %s2300
                  %s2319 = scalar_select %p2318, 0, %s2317
                  %s2320 = smul.u32 %s2319, 8
                  %s2321 = smul.u32 %s2319, 8
                  %s2322 = scalar_lea.vmem %s2303, %s2320 [#allocation7]
                  %s2323 = scalar_lea.vmem %s2305, %s2321
                $region102: #{tpu_custom_call.1} parent=89 // loop_footer
                  %s2309 = sadd.s32 %s2307, 1
                $region103: #{tpu_custom_call.1} parent=89 // loop_footer_branch
                  %2306 = sbr.rel target = $region99
                $region104: #{tpu_custom_call.1} parent=89 // loop_exit
                  _
              $region90: #{tpu_custom_call.1} parent=67 // pred_fallthru
                _
              // Predicated region
              $region105: #{tpu_custom_call.1} parent=67 // pred_check
                _
              $region106: #{tpu_custom_call.1} parent=67 // pred_check_branch
                %2325 = sbr.rel target = $region108
              $region107: #{tpu_custom_call.1} parent=67 // pred_region
                _
              $region108: #{tpu_custom_call.1} parent=67 // pred_fallthru
                _
            $region68: #{tpu_custom_call.1} parent=63 // pred_fallthru
              _
            // Predicated region
            $region69: #{tpu_custom_call.1} parent=63 // pred_check
              _
            $region70: #{tpu_custom_call.1} parent=63 // pred_check_branch
              %2193 = sbr.rel target = $region72
            $region71: #{tpu_custom_call.1} parent=63 // pred_region
              %s2195 = ssub.s32 256, 1
              %s2196 = sdiv.u32.pop %s2182, 10
              %s2197 = srem.u32.pop %s2182, 10
              // While loop
              $region73: #{tpu_custom_call.1} parent=71 // loop_pre_header
                _
              $region74: #{tpu_custom_call.1} parent=71 // loop_header
                %s2199 = sphi 0, %s2201
                %p2200 = scmp.ge.s32.totalorder %s2199, %s2196
                %s2204 = sphi 0, %s2229
                %s2205 = sphi %s2175, %s2232
                %s2206 = sphi %s2186, %s2233
              $region75: #{tpu_custom_call.1} parent=71 // loop_header_branch
                %2203 = sbr.rel (%p2200) target = $region79
              $region76: #{tpu_custom_call.1} parent=71 // loop_body
                %v2207 = vld [vmem:[%s2205] sm:%s2195]
                %2208 = vst [vmem:[%s2206] sm:%s2195] %v2207
                %v2209 = vld [vmem:[%s2205 + $0x8] sm:%s2195]
                %2210 = vst [vmem:[%s2206 + $0x8] sm:%s2195] %v2209
                %v2211 = vld [vmem:[%s2205 + $0x10] sm:%s2195]
                %2212 = vst [vmem:[%s2206 + $0x10] sm:%s2195] %v2211
                %v2213 = vld [vmem:[%s2205 + $0x18] sm:%s2195]
                %2214 = vst [vmem:[%s2206 + $0x18] sm:%s2195] %v2213
                %v2215 = vld [vmem:[%s2205 + $0x20] sm:%s2195]
                %2216 = vst [vmem:[%s2206 + $0x20] sm:%s2195] %v2215
                %v2217 = vld [vmem:[%s2205 + $0x28] sm:%s2195]
                %2218 = vst [vmem:[%s2206 + $0x28] sm:%s2195] %v2217
                %v2219 = vld [vmem:[%s2205 + $0x30] sm:%s2195]
                %2220 = vst [vmem:[%s2206 + $0x30] sm:%s2195] %v2219
                %v2221 = vld [vmem:[%s2205 + $0x38] sm:%s2195]
                %2222 = vst [vmem:[%s2206 + $0x38] sm:%s2195] %v2221
                %v2223 = vld [vmem:[%s2205 + $0x40] sm:%s2195]
                %2224 = vst [vmem:[%s2206 + $0x40] sm:%s2195] %v2223
                %v2225 = vld [vmem:[%s2205 + $0x48] sm:%s2195]
                %2226 = vst [vmem:[%s2206 + $0x48] sm:%s2195] %v2225
                %s2227 = sadd.s32 1, %s2204
                %p2228 = scmp.ge.s32.totalorder %s2227, %s2196
                %s2229 = scalar_select %p2228, 0, %s2227
                %s2230 = smul.u32 %s2229, 80
                %s2231 = smul.u32 %s2229, 80
                %s2232 = scalar_lea.vmem %s2175, %s2230 [#allocation7]
                %s2233 = scalar_lea.vmem %s2186, %s2231
              $region77: #{tpu_custom_call.1} parent=71 // loop_footer
                %s2201 = sadd.s32 %s2199, 1
              $region78: #{tpu_custom_call.1} parent=71 // loop_footer_branch
                %2198 = sbr.rel target = $region74
              $region79: #{tpu_custom_call.1} parent=71 // loop_exit
                _
              %s2234 = sdiv.u32.pop %s2182, 10
              %s2235 = srem.u32.pop %s2182, 10
              %s2236 = smul.u32 %s2234, 10
              %s2237 = smul.u32 8, %s2236
              %s2238 = scalar_lea.vmem %s2175, %s2237 [#allocation7]
              %s2239 = smul.u32 8, %s2236
              %s2240 = scalar_lea.vmem %s2186, %s2239
              // While loop
              $region80: #{tpu_custom_call.1} parent=71 // loop_pre_header
                _
              $region81: #{tpu_custom_call.1} parent=71 // loop_header
                %s2242 = sphi 0, %s2244
                %p2243 = scmp.ge.s32.totalorder %s2242, %s2235
                %s2247 = sphi 0, %s2254
                %s2248 = sphi %s2238, %s2257
                %s2249 = sphi %s2240, %s2258
              $region82: #{tpu_custom_call.1} parent=71 // loop_header_branch
                %2246 = sbr.rel (%p2243) target = $region86
              $region83: #{tpu_custom_call.1} parent=71 // loop_body
                %v2250 = vld [vmem:[%s2248] sm:%s2195]
                %2251 = vst [vmem:[%s2249] sm:%s2195] %v2250
                %s2252 = sadd.s32 1, %s2247
                %p2253 = scmp.ge.s32.totalorder %s2252, %s2235
                %s2254 = scalar_select %p2253, 0, %s2252
                %s2255 = smul.u32 %s2254, 8
                %s2256 = smul.u32 %s2254, 8
                %s2257 = scalar_lea.vmem %s2238, %s2255 [#allocation7]
                %s2258 = scalar_lea.vmem %s2240, %s2256
              $region84: #{tpu_custom_call.1} parent=71 // loop_footer
                %s2244 = sadd.s32 %s2242, 1
              $region85: #{tpu_custom_call.1} parent=71 // loop_footer_branch
                %2241 = sbr.rel target = $region81
              $region86: #{tpu_custom_call.1} parent=71 // loop_exit
                _
            $region72: #{tpu_custom_call.1} parent=63 // pred_fallthru
              _
          $region64: #{tpu_custom_call.1} parent=59 // pred_fallthru
            _
          %2326 = vnop
        $region60: #{tpu_custom_call.1} parent=43 // pred_fallthru
          _
      $region44: #{tpu_custom_call.1} parent=5 // pred_fallthru
        _
      %p2327 = scmp.le.s32.totalorder 2, %s14
      // Predicated region
      $region109: #{tpu_custom_call.1} parent=5 // pred_check
        %p2328 = pneg %p2327
      $region110: #{tpu_custom_call.1} parent=5 // pred_check_branch
        %2330 = sbr.rel (%p2328) target = $region112
      $region111: #{tpu_custom_call.1} parent=5 // pred_region
        %s2331 = ssub.s32 %s14, 2
        // Predicated region
        $region113: #{tpu_custom_call.1} parent=111 // pred_check
          %p2332 = pneg %p174
        $region114: #{tpu_custom_call.1} parent=111 // pred_check_branch
          %2334 = sbr.rel (%p2332) target = $region116
        $region115: #{tpu_custom_call.1} parent=111 // pred_region
          %s2335 = sand.u32 %s159, 1
          %s2336 = sand.u32 %s159, 1
          %s2337 = smul.addr %s2336, 80
          %s2338 = scalar_lea.vmem [#allocation7], %s2337
        $region116: #{tpu_custom_call.1} parent=111 // pred_fallthru
          _
      $region112: #{tpu_custom_call.1} parent=5 // pred_fallthru
        _
    $region6: #{tpu_custom_call.1} parent=1 // loop_footer
      %s18 = sadd.s32 1, %s14
    $region7: #{tpu_custom_call.1} parent=1 // loop_footer_branch
      %13 = sbr.rel target = $region3
    $region8: #{tpu_custom_call.1} parent=1 // loop_exit
      _
    %2339 = vsyncpa [#allocation3], 1
    %s2340 = scalar_lea.sflag [#allocation3], 1
    %2341 = vsyncpa %s2340, 1
    %2342 = vsyncpa [#allocation5], 1

</llo_original>
